<compile_context>
chip_gen: v6e
topology: v6e:2x2x1
jax: 0.10.0
libtpu: 0.0.40
codegen_flags: <defaults>
</compile_context>

<pallas_src>
import math
import functools

import jax
import jax.numpy as jnp
import numpy as np
from jax.experimental import pallas as pl
from jax.experimental.pallas import tpu as pltpu


# -----------------------------------------------------------------------------
# Fused kernel: embed(x1), embed(x2), grouped xcorr + fused group channel-sum
# -----------------------------------------------------------------------------
def _siamese_kernel(ref_slab_ref, srch_slab_ref, w_ref, o_ref, *,
                    bb, G, cg, h1, w1, ws, hw_r, hw_sp, hw_acc):
    # ref_slab_ref : (1, KKC1, bb*hw_r)   im2col of reference patches (+ ones row)
    # srch_slab_ref: (1, KKC1, bb*hw_sp)  im2col of search regions   (+ ones row, zero-padded)
    # w_ref        : (Cout, KKC1)         conv weight, bias folded in as last column
    # o_ref        : (1, bb*G, hw_acc)    flat corr map; hw_acc = Ho*ws, wrapper strips x >= Wo
    w = w_ref[...].astype(jnp.float32)
    cout = w.shape[0]

    # Embedding = ReLU(conv + bias): one MXU matmul per image for the whole batch block.
    e_ref = jnp.maximum(
        jnp.dot(w, ref_slab_ref[0].astype(jnp.float32),
                preferred_element_type=jnp.float32), 0.0)          # (Cout, bb*hw_r)
    e_srch = jnp.maximum(
        jnp.dot(w, srch_slab_ref[0].astype(jnp.float32),
                preferred_element_type=jnp.float32), 0.0)          # (Cout, bb*hw_sp)

    # Grouped cross-correlation on flat rows.  For flat output position p = y*ws + x
    # (only x < Wo kept by the wrapper) and tap (dy, dx), the source index is
    # p + dy*ws + dx, so each tap is ONE contiguous lane window of e_srch multiplied
    # by a (Cout, 1) reference column broadcast along lanes.
    for b in range(bb):
        rb = b * hw_r
        sb = b * hw_sp
        acc = jnp.zeros((cout, hw_acc), jnp.float32)
        # Tap offsets are lane indices into register-resident values, hence static
        # Python unroll (h1*w1 taps ~= 49 FMAs per batch element).
        for dy in range(h1):
            for dx in range(w1):
                rcol = rb + dy * w1 + dx
                soff = sb + dy * ws + dx
                wcol = e_ref[:, rcol:rcol + 1]                     # (Cout, 1)
                win = e_srch[:, soff:soff + hw_acc]                # (Cout, hw_acc)
                acc = acc + wcol * win
        # Fused per-group channel sum + lane-dense store.
        for g in range(G):
            row = acc[g * cg:g * cg + 1, :]
            for r in range(1, cg):
                row = row + acc[g * cg + r:g * cg + r + 1, :]
            o_ref[0, b * G + g:b * G + g + 1, :] = row


# -----------------------------------------------------------------------------
# Wrapper-side glue
# -----------------------------------------------------------------------------
def _im2col(x, K):
    # (B, C, H, W) -> (B, K*K*C, Hout*Wout); row order (ky*K + kx)*C + c matches the
    # (Cout, K*K*C) weight layout built in siamese_forward.
    B, C, H, W = x.shape
    Hout, Wout = H - K + 1, W - K + 1
    cols = [x[:, :, ky:ky + Hout, kx:kx + Wout] for ky in range(K) for kx in range(K)]
    p = jnp.stack(cols, axis=1)                                    # (B, K*K, C, Hout, Wout)
    return p.reshape(B, K * K * C, Hout * Wout)


def _fold_batch(slab, NB):
    # (B, R, L) -> (NB, R, (B//NB)*L), batch-major inside the lane axis.
    B, R, L = slab.shape
    bb = B // NB
    return slab.reshape(NB, bb, R, L).transpose(0, 2, 1, 3).reshape(NB, R, bb * L)


def _num_batch_blocks(B):
    # 2 parallel grid steps on dual-TensorCore parts (v7x / megacore), otherwise fold
    # the whole batch into a single step (v5e/v6e are single-TC: extra grid steps are
    # pure sequential overhead).  Wrong detection only costs a little perf, never
    # correctness.
    if B < 2 or B % 2 != 0:
        return 1
    try:
        kind = jax.devices()[0].device_kind.lower()
    except Exception:
        return 1
    dual_tc = any(t in kind for t in ("v7", "7x", "v4", "v5p"))
    return 2 if dual_tc else 1


def siamese_forward(params, x1, x2, eps=1e-5):
    B, Cin, H1, W1 = x1.shape
    B2, Cin2, H2, W2 = x2.shape
    assert B == B2 and Cin == Cin2
    w, bconv = params["conv_w"], params["conv_b"]
    Cout, _, K, _ = w.shape
    G = 3
    assert Cout % G == 0
    cg = Cout // G
    h1, w1 = H1 - K + 1, W1 - K + 1            # reference embedding spatial dims
    hs, ws = H2 - K + 1, W2 - K + 1            # search embedding spatial dims
    Ho, Wo = hs - h1 + 1, ws - w1 + 1          # correlation map spatial dims
    hw_r = h1 * w1
    hw_s = hs * ws
    hw_sp = hw_s + (w1 - 1)                    # pad so every tap window stays in-bounds
    hw_acc = Ho * ws                           # flat accumulator length (x >= Wo discarded)
    KKC1 = K * K * Cin + 1

    NB = _num_batch_blocks(B)
    bb = B // NB

    f32 = jnp.float32
    # Weight as (Cout, K*K*Cin) in (ky, kx, c) column order, bias folded in as a column.
    w2d = jnp.transpose(w, (0, 2, 3, 1)).reshape(Cout, K * K * Cin)
    w_aug = jnp.concatenate([w2d, bconv.reshape(Cout, 1)], axis=1).astype(f32)

    ref_slab = _im2col(x1.astype(f32), K)                                      # (B, KKC, hw_r)
    ref_slab = jnp.concatenate([ref_slab, jnp.ones((B, 1, hw_r), f32)], axis=1)
    srch_slab = _im2col(x2.astype(f32), K)                                     # (B, KKC, hw_s)
    srch_slab = jnp.concatenate([srch_slab, jnp.ones((B, 1, hw_s), f32)], axis=1)
    srch_slab = jnp.pad(srch_slab, ((0, 0), (0, 0), (0, hw_sp - hw_s)))        # zeros -> relu(0)=0

    ref_slab = _fold_batch(ref_slab, NB)       # (NB, KKC1, bb*hw_r)
    srch_slab = _fold_batch(srch_slab, NB)     # (NB, KKC1, bb*hw_sp)

    corr_flat = pl.pallas_call(
        functools.partial(_siamese_kernel, bb=bb, G=G, cg=cg, h1=h1, w1=w1,
                          ws=ws, hw_r=hw_r, hw_sp=hw_sp, hw_acc=hw_acc),
        out_shape=jax.ShapeDtypeStruct((NB, bb * G, hw_acc), f32),
        grid=(NB,),
        in_specs=[
            pl.BlockSpec((1, KKC1, bb * hw_r), lambda i: (i, 0, 0)),
            pl.BlockSpec((1, KKC1, bb * hw_sp), lambda i: (i, 0, 0)),
            pl.BlockSpec((Cout, KKC1), lambda i: (0, 0)),
        ],
        out_specs=pl.BlockSpec((1, bb * G, hw_acc), lambda i: (i, 0, 0)),
        compiler_params=pltpu.CompilerParams(dimension_semantics=("parallel",)),
    )(ref_slab, srch_slab, w_aug)

    # Strip the flat-row padding: p = y*ws + x, keep x < Wo.
    corr = corr_flat.reshape(NB, bb, G, Ho, ws)[..., :Wo].reshape(B, G, Ho, Wo)
    corr = corr.astype(x2.dtype)

    # BatchNorm2d(3), training-mode batch statistics (biased variance), eps=1e-5.
    # Kept in plain JAX: ~B*3*81 elements, fused by XLA into one tiny op.
    mean = jnp.mean(corr, axis=(0, 2, 3), keepdims=True)
    var = jnp.mean((corr - mean) ** 2, axis=(0, 2, 3), keepdims=True)
    inv = jax.lax.rsqrt(var + eps)
    out = (corr - mean) * inv * params["bn_gamma"].reshape(1, G, 1, 1) \
          + params["bn_beta"].reshape(1, G, 1, 1)
    # TODO(synk): BatchNorm running_mean/running_var buffer updates are not modeled
    # (they do not affect the training-mode forward output).
    return out


# -----------------------------------------------------------------------------
# Pure-JAX reference (correctness check only)
# -----------------------------------------------------------------------------
def reference_forward(params, x1, x2, eps=1e-5):
    w, bconv = params["conv_w"], params["conv_b"]

    def embed(x):
        y = jax.lax.conv_general_dilated(
            x, w, window_strides=(1, 1), padding="VALID",
            dimension_numbers=("NCHW", "OIHW", "NCHW"),
            precision=jax.lax.Precision.HIGHEST)
        return jnp.maximum(y + bconv.reshape(1, -1, 1, 1), 0.0)

    er, es = embed(x1), embed(x2)
    b, c, h, wd = es.shape
    b1, c1, h1, w1 = er.shape
    srch_r = es.reshape(1, b * c, h, wd)
    ref_r = er.reshape(b1 * 3, (b1 * c1) // (b1 * 3), h1, w1)
    mm = jax.lax.conv_general_dilated(
        srch_r, ref_r, (1, 1), "VALID",
        dimension_numbers=("NCHW", "OIHW", "NCHW"),
        feature_group_count=b1 * 3,
        precision=jax.lax.Precision.HIGHEST)
    mm = mm.reshape(b, mm.shape[1] // b, mm.shape[2], mm.shape[3])
    mean = jnp.mean(mm, axis=(0, 2, 3), keepdims=True)
    var = jnp.mean((mm - mean) ** 2, axis=(0, 2, 3), keepdims=True)
    return (mm - mean) / jnp.sqrt(var + eps) * params["bn_gamma"].reshape(1, -1, 1, 1) \
           + params["bn_beta"].reshape(1, -1, 1, 1)


if __name__ == "__main__":
    key = jax.random.PRNGKey(0)
    k1, k2, k3, k4 = jax.random.split(key, 4)

    B, Cin, Cout, K = 2, 3, 6, 3
    # x1 = reference patch, x2 = search region (small shapes consistent with the module)
    x1 = jax.random.normal(k1, (B, Cin, 9, 9), jnp.float32)
    x2 = jax.random.normal(k2, (B, Cin, 17, 17), jnp.float32)

    fan_in = Cin * K * K
    params = {
        # deterministic synthetic init (xavier-ish scale) for the embedding conv
        "conv_w": jax.random.normal(k3, (Cout, Cin, K, K), jnp.float32) / math.sqrt(fan_in),
        "conv_b": 0.1 * jax.random.normal(k4, (Cout,), jnp.float32),
        # nn.BatchNorm2d(3) default init: weight=1, bias=0
        "bn_gamma": jnp.ones((3,), jnp.float32),
        "bn_beta": jnp.zeros((3,), jnp.float32),
    }

    out = jax.block_until_ready(jax.jit(siamese_forward)(params, x1, x2))
    ref = jax.block_until_ready(reference_forward(params, x1, x2))

    assert out.shape == (B, 3, 9, 9), out.shape
    np.testing.assert_allclose(np.asarray(out), np.asarray(ref), rtol=1e-3, atol=1e-3)
    print("KERNEL_OK")
</pallas_src>

<mosaic_0001>
module attributes {stable_mosaic.version = 11 : i64} {
  func.func @_siamese_kernel(%arg0: i32, %arg1: memref<1x28x98xf32, #tpu.memory_space<vmem>>, %arg2: memref<1x28x462xf32, #tpu.memory_space<vmem>>, %arg3: memref<6x28xf32, #tpu.memory_space<vmem>>, %arg4: memref<1x6x135xf32, #tpu.memory_space<vmem>>) attributes {dimension_semantics = [#tpu.dimension_semantics<parallel>], iteration_bounds = array<i64: 1>, scalar_prefetch = 0 : i64, scratch_operands = 0 : i64, tpu.core_type = #tpu.core_type<tc>, window_params = [{transform_indices = @transform_0, window_bounds = array<i64: 1, 28, 98>}, {transform_indices = @transform_1, window_bounds = array<i64: 1, 28, 462>}, {pipeline_mode = #tpu.pipeline_mode<synchronous>, transform_indices = @transform_2, window_bounds = array<i64: 6, 28>}, {transform_indices = @transform_3, window_bounds = array<i64: 1, 6, 135>}]} {
    %c0 = arith.constant 0 : index
    %c0_0 = arith.constant 0 : index
    %0 = vector.load %arg3[%c0, %c0_0] : memref<6x28xf32, #tpu.memory_space<vmem>>, vector<6x28xf32>
    %c0_1 = arith.constant 0 : index
    %c0_2 = arith.constant 0 : index
    %c0_3 = arith.constant 0 : index
    %1 = vector.load %arg1[%c0_1, %c0_2, %c0_3] : memref<1x28x98xf32, #tpu.memory_space<vmem>>, vector<1x28x98xf32>
    %2 = vector.shape_cast %1 : vector<1x28x98xf32> to vector<28x98xf32>
    %cst = arith.constant dense<0.000000e+00> : vector<6x98xf32>
    %3 = tpu.matmul %0, %2, %cst {dimension_numbers = #tpu.dot_dimension_numbers<[1], [0], [0], [1], [0, 0, 1, 1], [], []>} : vector<6x28xf32>, vector<28x98xf32>, vector<6x98xf32> -> vector<6x98xf32>
    %cst_4 = arith.constant 0.000000e+00 : f32
    %4 = vector.broadcast %cst_4 : f32 to vector<6x98xf32>
    %5 = arith.maximumf %3, %4 : vector<6x98xf32>
    %c0_5 = arith.constant 0 : index
    %c0_6 = arith.constant 0 : index
    %c0_7 = arith.constant 0 : index
    %6 = vector.load %arg2[%c0_5, %c0_6, %c0_7] : memref<1x28x462xf32, #tpu.memory_space<vmem>>, vector<1x28x462xf32>
    %7 = vector.shape_cast %6 : vector<1x28x462xf32> to vector<28x462xf32>
    %cst_8 = arith.constant dense<0.000000e+00> : vector<6x462xf32>
    %8 = tpu.matmul %0, %7, %cst_8 {dimension_numbers = #tpu.dot_dimension_numbers<[1], [0], [0], [1], [0, 0, 1, 1], [], []>} : vector<6x28xf32>, vector<28x462xf32>, vector<6x462xf32> -> vector<6x462xf32>
    %cst_9 = arith.constant 0.000000e+00 : f32
    %9 = vector.broadcast %cst_9 : f32 to vector<6x462xf32>
    %10 = arith.maximumf %8, %9 : vector<6x462xf32>
    %cst_10 = arith.constant 0.000000e+00 : f32
    %11 = vector.broadcast %cst_10 : f32 to vector<6x135xf32>
    %12 = vector.extract_strided_slice %5 {offsets = [0, 0], sizes = [6, 1], strides = [1, 1]} : vector<6x98xf32> to vector<6x1xf32>
    %13 = vector.extract_strided_slice %10 {offsets = [0, 0], sizes = [6, 135], strides = [1, 1]} : vector<6x462xf32> to vector<6x135xf32>
    %14 = vector.broadcast %12 : vector<6x1xf32> to vector<6x135xf32>
    %15 = arith.mulf %14, %13 : vector<6x135xf32>
    %16 = arith.addf %11, %15 : vector<6x135xf32>
    %17 = vector.extract_strided_slice %5 {offsets = [0, 1], sizes = [6, 1], strides = [1, 1]} : vector<6x98xf32> to vector<6x1xf32>
    %18 = vector.extract_strided_slice %10 {offsets = [0, 1], sizes = [6, 135], strides = [1, 1]} : vector<6x462xf32> to vector<6x135xf32>
    %19 = vector.broadcast %17 : vector<6x1xf32> to vector<6x135xf32>
    %20 = arith.mulf %19, %18 : vector<6x135xf32>
    %21 = arith.addf %16, %20 : vector<6x135xf32>
    %22 = vector.extract_strided_slice %5 {offsets = [0, 2], sizes = [6, 1], strides = [1, 1]} : vector<6x98xf32> to vector<6x1xf32>
    %23 = vector.extract_strided_slice %10 {offsets = [0, 2], sizes = [6, 135], strides = [1, 1]} : vector<6x462xf32> to vector<6x135xf32>
    %24 = vector.broadcast %22 : vector<6x1xf32> to vector<6x135xf32>
    %25 = arith.mulf %24, %23 : vector<6x135xf32>
    %26 = arith.addf %21, %25 : vector<6x135xf32>
    %27 = vector.extract_strided_slice %5 {offsets = [0, 3], sizes = [6, 1], strides = [1, 1]} : vector<6x98xf32> to vector<6x1xf32>
    %28 = vector.extract_strided_slice %10 {offsets = [0, 3], sizes = [6, 135], strides = [1, 1]} : vector<6x462xf32> to vector<6x135xf32>
    %29 = vector.broadcast %27 : vector<6x1xf32> to vector<6x135xf32>
    %30 = arith.mulf %29, %28 : vector<6x135xf32>
    %31 = arith.addf %26, %30 : vector<6x135xf32>
    %32 = vector.extract_strided_slice %5 {offsets = [0, 4], sizes = [6, 1], strides = [1, 1]} : vector<6x98xf32> to vector<6x1xf32>
    %33 = vector.extract_strided_slice %10 {offsets = [0, 4], sizes = [6, 135], strides = [1, 1]} : vector<6x462xf32> to vector<6x135xf32>
    %34 = vector.broadcast %32 : vector<6x1xf32> to vector<6x135xf32>
    %35 = arith.mulf %34, %33 : vector<6x135xf32>
    %36 = arith.addf %31, %35 : vector<6x135xf32>
    %37 = vector.extract_strided_slice %5 {offsets = [0, 5], sizes = [6, 1], strides = [1, 1]} : vector<6x98xf32> to vector<6x1xf32>
    %38 = vector.extract_strided_slice %10 {offsets = [0, 5], sizes = [6, 135], strides = [1, 1]} : vector<6x462xf32> to vector<6x135xf32>
    %39 = vector.broadcast %37 : vector<6x1xf32> to vector<6x135xf32>
    %40 = arith.mulf %39, %38 : vector<6x135xf32>
    %41 = arith.addf %36, %40 : vector<6x135xf32>
    %42 = vector.extract_strided_slice %5 {offsets = [0, 6], sizes = [6, 1], strides = [1, 1]} : vector<6x98xf32> to vector<6x1xf32>
    %43 = vector.extract_strided_slice %10 {offsets = [0, 6], sizes = [6, 135], strides = [1, 1]} : vector<6x462xf32> to vector<6x135xf32>
    %44 = vector.broadcast %42 : vector<6x1xf32> to vector<6x135xf32>
    %45 = arith.mulf %44, %43 : vector<6x135xf32>
    %46 = arith.addf %41, %45 : vector<6x135xf32>
    %47 = vector.extract_strided_slice %5 {offsets = [0, 7], sizes = [6, 1], strides = [1, 1]} : vector<6x98xf32> to vector<6x1xf32>
    %48 = vector.extract_strided_slice %10 {offsets = [0, 15], sizes = [6, 135], strides = [1, 1]} : vector<6x462xf32> to vector<6x135xf32>
    %49 = vector.broadcast %47 : vector<6x1xf32> to vector<6x135xf32>
    %50 = arith.mulf %49, %48 : vector<6x135xf32>
    %51 = arith.addf %46, %50 : vector<6x135xf32>
    %52 = vector.extract_strided_slice %5 {offsets = [0, 8], sizes = [6, 1], strides = [1, 1]} : vector<6x98xf32> to vector<6x1xf32>
    %53 = vector.extract_strided_slice %10 {offsets = [0, 16], sizes = [6, 135], strides = [1, 1]} : vector<6x462xf32> to vector<6x135xf32>
    %54 = vector.broadcast %52 : vector<6x1xf32> to vector<6x135xf32>
    %55 = arith.mulf %54, %53 : vector<6x135xf32>
    %56 = arith.addf %51, %55 : vector<6x135xf32>
    %57 = vector.extract_strided_slice %5 {offsets = [0, 9], sizes = [6, 1], strides = [1, 1]} : vector<6x98xf32> to vector<6x1xf32>
    %58 = vector.extract_strided_slice %10 {offsets = [0, 17], sizes = [6, 135], strides = [1, 1]} : vector<6x462xf32> to vector<6x135xf32>
    %59 = vector.broadcast %57 : vector<6x1xf32> to vector<6x135xf32>
    %60 = arith.mulf %59, %58 : vector<6x135xf32>
    %61 = arith.addf %56, %60 : vector<6x135xf32>
    %62 = vector.extract_strided_slice %5 {offsets = [0, 10], sizes = [6, 1], strides = [1, 1]} : vector<6x98xf32> to vector<6x1xf32>
    %63 = vector.extract_strided_slice %10 {offsets = [0, 18], sizes = [6, 135], strides = [1, 1]} : vector<6x462xf32> to vector<6x135xf32>
    %64 = vector.broadcast %62 : vector<6x1xf32> to vector<6x135xf32>
    %65 = arith.mulf %64, %63 : vector<6x135xf32>
    %66 = arith.addf %61, %65 : vector<6x135xf32>
    %67 = vector.extract_strided_slice %5 {offsets = [0, 11], sizes = [6, 1], strides = [1, 1]} : vector<6x98xf32> to vector<6x1xf32>
    %68 = vector.extract_strided_slice %10 {offsets = [0, 19], sizes = [6, 135], strides = [1, 1]} : vector<6x462xf32> to vector<6x135xf32>
    %69 = vector.broadcast %67 : vector<6x1xf32> to vector<6x135xf32>
    %70 = arith.mulf %69, %68 : vector<6x135xf32>
    %71 = arith.addf %66, %70 : vector<6x135xf32>
    %72 = vector.extract_strided_slice %5 {offsets = [0, 12], sizes = [6, 1], strides = [1, 1]} : vector<6x98xf32> to vector<6x1xf32>
    %73 = vector.extract_strided_slice %10 {offsets = [0, 20], sizes = [6, 135], strides = [1, 1]} : vector<6x462xf32> to vector<6x135xf32>
    %74 = vector.broadcast %72 : vector<6x1xf32> to vector<6x135xf32>
    %75 = arith.mulf %74, %73 : vector<6x135xf32>
    %76 = arith.addf %71, %75 : vector<6x135xf32>
    %77 = vector.extract_strided_slice %5 {offsets = [0, 13], sizes = [6, 1], strides = [1, 1]} : vector<6x98xf32> to vector<6x1xf32>
    %78 = vector.extract_strided_slice %10 {offsets = [0, 21], sizes = [6, 135], strides = [1, 1]} : vector<6x462xf32> to vector<6x135xf32>
    %79 = vector.broadcast %77 : vector<6x1xf32> to vector<6x135xf32>
    %80 = arith.mulf %79, %78 : vector<6x135xf32>
    %81 = arith.addf %76, %80 : vector<6x135xf32>
    %82 = vector.extract_strided_slice %5 {offsets = [0, 14], sizes = [6, 1], strides = [1, 1]} : vector<6x98xf32> to vector<6x1xf32>
    %83 = vector.extract_strided_slice %10 {offsets = [0, 30], sizes = [6, 135], strides = [1, 1]} : vector<6x462xf32> to vector<6x135xf32>
    %84 = vector.broadcast %82 : vector<6x1xf32> to vector<6x135xf32>
    %85 = arith.mulf %84, %83 : vector<6x135xf32>
    %86 = arith.addf %81, %85 : vector<6x135xf32>
    %87 = vector.extract_strided_slice %5 {offsets = [0, 15], sizes = [6, 1], strides = [1, 1]} : vector<6x98xf32> to vector<6x1xf32>
    %88 = vector.extract_strided_slice %10 {offsets = [0, 31], sizes = [6, 135], strides = [1, 1]} : vector<6x462xf32> to vector<6x135xf32>
    %89 = vector.broadcast %87 : vector<6x1xf32> to vector<6x135xf32>
    %90 = arith.mulf %89, %88 : vector<6x135xf32>
    %91 = arith.addf %86, %90 : vector<6x135xf32>
    %92 = vector.extract_strided_slice %5 {offsets = [0, 16], sizes = [6, 1], strides = [1, 1]} : vector<6x98xf32> to vector<6x1xf32>
    %93 = vector.extract_strided_slice %10 {offsets = [0, 32], sizes = [6, 135], strides = [1, 1]} : vector<6x462xf32> to vector<6x135xf32>
    %94 = vector.broadcast %92 : vector<6x1xf32> to vector<6x135xf32>
    %95 = arith.mulf %94, %93 : vector<6x135xf32>
    %96 = arith.addf %91, %95 : vector<6x135xf32>
    %97 = vector.extract_strided_slice %5 {offsets = [0, 17], sizes = [6, 1], strides = [1, 1]} : vector<6x98xf32> to vector<6x1xf32>
    %98 = vector.extract_strided_slice %10 {offsets = [0, 33], sizes = [6, 135], strides = [1, 1]} : vector<6x462xf32> to vector<6x135xf32>
    %99 = vector.broadcast %97 : vector<6x1xf32> to vector<6x135xf32>
    %100 = arith.mulf %99, %98 : vector<6x135xf32>
    %101 = arith.addf %96, %100 : vector<6x135xf32>
    %102 = vector.extract_strided_slice %5 {offsets = [0, 18], sizes = [6, 1], strides = [1, 1]} : vector<6x98xf32> to vector<6x1xf32>
    %103 = vector.extract_strided_slice %10 {offsets = [0, 34], sizes = [6, 135], strides = [1, 1]} : vector<6x462xf32> to vector<6x135xf32>
    %104 = vector.broadcast %102 : vector<6x1xf32> to vector<6x135xf32>
    %105 = arith.mulf %104, %103 : vector<6x135xf32>
    %106 = arith.addf %101, %105 : vector<6x135xf32>
    %107 = vector.extract_strided_slice %5 {offsets = [0, 19], sizes = [6, 1], strides = [1, 1]} : vector<6x98xf32> to vector<6x1xf32>
    %108 = vector.extract_strided_slice %10 {offsets = [0, 35], sizes = [6, 135], strides = [1, 1]} : vector<6x462xf32> to vector<6x135xf32>
    %109 = vector.broadcast %107 : vector<6x1xf32> to vector<6x135xf32>
    %110 = arith.mulf %109, %108 : vector<6x135xf32>
    %111 = arith.addf %106, %110 : vector<6x135xf32>
    %112 = vector.extract_strided_slice %5 {offsets = [0, 20], sizes = [6, 1], strides = [1, 1]} : vector<6x98xf32> to vector<6x1xf32>
    %113 = vector.extract_strided_slice %10 {offsets = [0, 36], sizes = [6, 135], strides = [1, 1]} : vector<6x462xf32> to vector<6x135xf32>
    %114 = vector.broadcast %112 : vector<6x1xf32> to vector<6x135xf32>
    %115 = arith.mulf %114, %113 : vector<6x135xf32>
    %116 = arith.addf %111, %115 : vector<6x135xf32>
    %117 = vector.extract_strided_slice %5 {offsets = [0, 21], sizes = [6, 1], strides = [1, 1]} : vector<6x98xf32> to vector<6x1xf32>
    %118 = vector.extract_strided_slice %10 {offsets = [0, 45], sizes = [6, 135], strides = [1, 1]} : vector<6x462xf32> to vector<6x135xf32>
    %119 = vector.broadcast %117 : vector<6x1xf32> to vector<6x135xf32>
    %120 = arith.mulf %119, %118 : vector<6x135xf32>
    %121 = arith.addf %116, %120 : vector<6x135xf32>
    %122 = vector.extract_strided_slice %5 {offsets = [0, 22], sizes = [6, 1], strides = [1, 1]} : vector<6x98xf32> to vector<6x1xf32>
    %123 = vector.extract_strided_slice %10 {offsets = [0, 46], sizes = [6, 135], strides = [1, 1]} : vector<6x462xf32> to vector<6x135xf32>
    %124 = vector.broadcast %122 : vector<6x1xf32> to vector<6x135xf32>
    %125 = arith.mulf %124, %123 : vector<6x135xf32>
    %126 = arith.addf %121, %125 : vector<6x135xf32>
    %127 = vector.extract_strided_slice %5 {offsets = [0, 23], sizes = [6, 1], strides = [1, 1]} : vector<6x98xf32> to vector<6x1xf32>
    %128 = vector.extract_strided_slice %10 {offsets = [0, 47], sizes = [6, 135], strides = [1, 1]} : vector<6x462xf32> to vector<6x135xf32>
    %129 = vector.broadcast %127 : vector<6x1xf32> to vector<6x135xf32>
    %130 = arith.mulf %129, %128 : vector<6x135xf32>
    %131 = arith.addf %126, %130 : vector<6x135xf32>
    %132 = vector.extract_strided_slice %5 {offsets = [0, 24], sizes = [6, 1], strides = [1, 1]} : vector<6x98xf32> to vector<6x1xf32>
    %133 = vector.extract_strided_slice %10 {offsets = [0, 48], sizes = [6, 135], strides = [1, 1]} : vector<6x462xf32> to vector<6x135xf32>
    %134 = vector.broadcast %132 : vector<6x1xf32> to vector<6x135xf32>
    %135 = arith.mulf %134, %133 : vector<6x135xf32>
    %136 = arith.addf %131, %135 : vector<6x135xf32>
    %137 = vector.extract_strided_slice %5 {offsets = [0, 25], sizes = [6, 1], strides = [1, 1]} : vector<6x98xf32> to vector<6x1xf32>
    %138 = vector.extract_strided_slice %10 {offsets = [0, 49], sizes = [6, 135], strides = [1, 1]} : vector<6x462xf32> to vector<6x135xf32>
    %139 = vector.broadcast %137 : vector<6x1xf32> to vector<6x135xf32>
    %140 = arith.mulf %139, %138 : vector<6x135xf32>
    %141 = arith.addf %136, %140 : vector<6x135xf32>
    %142 = vector.extract_strided_slice %5 {offsets = [0, 26], sizes = [6, 1], strides = [1, 1]} : vector<6x98xf32> to vector<6x1xf32>
    %143 = vector.extract_strided_slice %10 {offsets = [0, 50], sizes = [6, 135], strides = [1, 1]} : vector<6x462xf32> to vector<6x135xf32>
    %144 = vector.broadcast %142 : vector<6x1xf32> to vector<6x135xf32>
    %145 = arith.mulf %144, %143 : vector<6x135xf32>
    %146 = arith.addf %141, %145 : vector<6x135xf32>
    %147 = vector.extract_strided_slice %5 {offsets = [0, 27], sizes = [6, 1], strides = [1, 1]} : vector<6x98xf32> to vector<6x1xf32>
    %148 = vector.extract_strided_slice %10 {offsets = [0, 51], sizes = [6, 135], strides = [1, 1]} : vector<6x462xf32> to vector<6x135xf32>
    %149 = vector.broadcast %147 : vector<6x1xf32> to vector<6x135xf32>
    %150 = arith.mulf %149, %148 : vector<6x135xf32>
    %151 = arith.addf %146, %150 : vector<6x135xf32>
    %152 = vector.extract_strided_slice %5 {offsets = [0, 28], sizes = [6, 1], strides = [1, 1]} : vector<6x98xf32> to vector<6x1xf32>
    %153 = vector.extract_strided_slice %10 {offsets = [0, 60], sizes = [6, 135], strides = [1, 1]} : vector<6x462xf32> to vector<6x135xf32>
    %154 = vector.broadcast %152 : vector<6x1xf32> to vector<6x135xf32>
    %155 = arith.mulf %154, %153 : vector<6x135xf32>
    %156 = arith.addf %151, %155 : vector<6x135xf32>
    %157 = vector.extract_strided_slice %5 {offsets = [0, 29], sizes = [6, 1], strides = [1, 1]} : vector<6x98xf32> to vector<6x1xf32>
    %158 = vector.extract_strided_slice %10 {offsets = [0, 61], sizes = [6, 135], strides = [1, 1]} : vector<6x462xf32> to vector<6x135xf32>
    %159 = vector.broadcast %157 : vector<6x1xf32> to vector<6x135xf32>
    %160 = arith.mulf %159, %158 : vector<6x135xf32>
    %161 = arith.addf %156, %160 : vector<6x135xf32>
    %162 = vector.extract_strided_slice %5 {offsets = [0, 30], sizes = [6, 1], strides = [1, 1]} : vector<6x98xf32> to vector<6x1xf32>
    %163 = vector.extract_strided_slice %10 {offsets = [0, 62], sizes = [6, 135], strides = [1, 1]} : vector<6x462xf32> to vector<6x135xf32>
    %164 = vector.broadcast %162 : vector<6x1xf32> to vector<6x135xf32>
    %165 = arith.mulf %164, %163 : vector<6x135xf32>
    %166 = arith.addf %161, %165 : vector<6x135xf32>
    %167 = vector.extract_strided_slice %5 {offsets = [0, 31], sizes = [6, 1], strides = [1, 1]} : vector<6x98xf32> to vector<6x1xf32>
    %168 = vector.extract_strided_slice %10 {offsets = [0, 63], sizes = [6, 135], strides = [1, 1]} : vector<6x462xf32> to vector<6x135xf32>
    %169 = vector.broadcast %167 : vector<6x1xf32> to vector<6x135xf32>
    %170 = arith.mulf %169, %168 : vector<6x135xf32>
    %171 = arith.addf %166, %170 : vector<6x135xf32>
    %172 = vector.extract_strided_slice %5 {offsets = [0, 32], sizes = [6, 1], strides = [1, 1]} : vector<6x98xf32> to vector<6x1xf32>
    %173 = vector.extract_strided_slice %10 {offsets = [0, 64], sizes = [6, 135], strides = [1, 1]} : vector<6x462xf32> to vector<6x135xf32>
    %174 = vector.broadcast %172 : vector<6x1xf32> to vector<6x135xf32>
    %175 = arith.mulf %174, %173 : vector<6x135xf32>
    %176 = arith.addf %171, %175 : vector<6x135xf32>
    %177 = vector.extract_strided_slice %5 {offsets = [0, 33], sizes = [6, 1], strides = [1, 1]} : vector<6x98xf32> to vector<6x1xf32>
    %178 = vector.extract_strided_slice %10 {offsets = [0, 65], sizes = [6, 135], strides = [1, 1]} : vector<6x462xf32> to vector<6x135xf32>
    %179 = vector.broadcast %177 : vector<6x1xf32> to vector<6x135xf32>
    %180 = arith.mulf %179, %178 : vector<6x135xf32>
    %181 = arith.addf %176, %180 : vector<6x135xf32>
    %182 = vector.extract_strided_slice %5 {offsets = [0, 34], sizes = [6, 1], strides = [1, 1]} : vector<6x98xf32> to vector<6x1xf32>
    %183 = vector.extract_strided_slice %10 {offsets = [0, 66], sizes = [6, 135], strides = [1, 1]} : vector<6x462xf32> to vector<6x135xf32>
    %184 = vector.broadcast %182 : vector<6x1xf32> to vector<6x135xf32>
    %185 = arith.mulf %184, %183 : vector<6x135xf32>
    %186 = arith.addf %181, %185 : vector<6x135xf32>
    %187 = vector.extract_strided_slice %5 {offsets = [0, 35], sizes = [6, 1], strides = [1, 1]} : vector<6x98xf32> to vector<6x1xf32>
    %188 = vector.extract_strided_slice %10 {offsets = [0, 75], sizes = [6, 135], strides = [1, 1]} : vector<6x462xf32> to vector<6x135xf32>
    %189 = vector.broadcast %187 : vector<6x1xf32> to vector<6x135xf32>
    %190 = arith.mulf %189, %188 : vector<6x135xf32>
    %191 = arith.addf %186, %190 : vector<6x135xf32>
    %192 = vector.extract_strided_slice %5 {offsets = [0, 36], sizes = [6, 1], strides = [1, 1]} : vector<6x98xf32> to vector<6x1xf32>
    %193 = vector.extract_strided_slice %10 {offsets = [0, 76], sizes = [6, 135], strides = [1, 1]} : vector<6x462xf32> to vector<6x135xf32>
    %194 = vector.broadcast %192 : vector<6x1xf32> to vector<6x135xf32>
    %195 = arith.mulf %194, %193 : vector<6x135xf32>
    %196 = arith.addf %191, %195 : vector<6x135xf32>
    %197 = vector.extract_strided_slice %5 {offsets = [0, 37], sizes = [6, 1], strides = [1, 1]} : vector<6x98xf32> to vector<6x1xf32>
    %198 = vector.extract_strided_slice %10 {offsets = [0, 77], sizes = [6, 135], strides = [1, 1]} : vector<6x462xf32> to vector<6x135xf32>
    %199 = vector.broadcast %197 : vector<6x1xf32> to vector<6x135xf32>
    %200 = arith.mulf %199, %198 : vector<6x135xf32>
    %201 = arith.addf %196, %200 : vector<6x135xf32>
    %202 = vector.extract_strided_slice %5 {offsets = [0, 38], sizes = [6, 1], strides = [1, 1]} : vector<6x98xf32> to vector<6x1xf32>
    %203 = vector.extract_strided_slice %10 {offsets = [0, 78], sizes = [6, 135], strides = [1, 1]} : vector<6x462xf32> to vector<6x135xf32>
    %204 = vector.broadcast %202 : vector<6x1xf32> to vector<6x135xf32>
    %205 = arith.mulf %204, %203 : vector<6x135xf32>
    %206 = arith.addf %201, %205 : vector<6x135xf32>
    %207 = vector.extract_strided_slice %5 {offsets = [0, 39], sizes = [6, 1], strides = [1, 1]} : vector<6x98xf32> to vector<6x1xf32>
    %208 = vector.extract_strided_slice %10 {offsets = [0, 79], sizes = [6, 135], strides = [1, 1]} : vector<6x462xf32> to vector<6x135xf32>
    %209 = vector.broadcast %207 : vector<6x1xf32> to vector<6x135xf32>
    %210 = arith.mulf %209, %208 : vector<6x135xf32>
    %211 = arith.addf %206, %210 : vector<6x135xf32>
    %212 = vector.extract_strided_slice %5 {offsets = [0, 40], sizes = [6, 1], strides = [1, 1]} : vector<6x98xf32> to vector<6x1xf32>
    %213 = vector.extract_strided_slice %10 {offsets = [0, 80], sizes = [6, 135], strides = [1, 1]} : vector<6x462xf32> to vector<6x135xf32>
    %214 = vector.broadcast %212 : vector<6x1xf32> to vector<6x135xf32>
    %215 = arith.mulf %214, %213 : vector<6x135xf32>
    %216 = arith.addf %211, %215 : vector<6x135xf32>
    %217 = vector.extract_strided_slice %5 {offsets = [0, 41], sizes = [6, 1], strides = [1, 1]} : vector<6x98xf32> to vector<6x1xf32>
    %218 = vector.extract_strided_slice %10 {offsets = [0, 81], sizes = [6, 135], strides = [1, 1]} : vector<6x462xf32> to vector<6x135xf32>
    %219 = vector.broadcast %217 : vector<6x1xf32> to vector<6x135xf32>
    %220 = arith.mulf %219, %218 : vector<6x135xf32>
    %221 = arith.addf %216, %220 : vector<6x135xf32>
    %222 = vector.extract_strided_slice %5 {offsets = [0, 42], sizes = [6, 1], strides = [1, 1]} : vector<6x98xf32> to vector<6x1xf32>
    %223 = vector.extract_strided_slice %10 {offsets = [0, 90], sizes = [6, 135], strides = [1, 1]} : vector<6x462xf32> to vector<6x135xf32>
    %224 = vector.broadcast %222 : vector<6x1xf32> to vector<6x135xf32>
    %225 = arith.mulf %224, %223 : vector<6x135xf32>
    %226 = arith.addf %221, %225 : vector<6x135xf32>
    %227 = vector.extract_strided_slice %5 {offsets = [0, 43], sizes = [6, 1], strides = [1, 1]} : vector<6x98xf32> to vector<6x1xf32>
    %228 = vector.extract_strided_slice %10 {offsets = [0, 91], sizes = [6, 135], strides = [1, 1]} : vector<6x462xf32> to vector<6x135xf32>
    %229 = vector.broadcast %227 : vector<6x1xf32> to vector<6x135xf32>
    %230 = arith.mulf %229, %228 : vector<6x135xf32>
    %231 = arith.addf %226, %230 : vector<6x135xf32>
    %232 = vector.extract_strided_slice %5 {offsets = [0, 44], sizes = [6, 1], strides = [1, 1]} : vector<6x98xf32> to vector<6x1xf32>
    %233 = vector.extract_strided_slice %10 {offsets = [0, 92], sizes = [6, 135], strides = [1, 1]} : vector<6x462xf32> to vector<6x135xf32>
    %234 = vector.broadcast %232 : vector<6x1xf32> to vector<6x135xf32>
    %235 = arith.mulf %234, %233 : vector<6x135xf32>
    %236 = arith.addf %231, %235 : vector<6x135xf32>
    %237 = vector.extract_strided_slice %5 {offsets = [0, 45], sizes = [6, 1], strides = [1, 1]} : vector<6x98xf32> to vector<6x1xf32>
    %238 = vector.extract_strided_slice %10 {offsets = [0, 93], sizes = [6, 135], strides = [1, 1]} : vector<6x462xf32> to vector<6x135xf32>
    %239 = vector.broadcast %237 : vector<6x1xf32> to vector<6x135xf32>
    %240 = arith.mulf %239, %238 : vector<6x135xf32>
    %241 = arith.addf %236, %240 : vector<6x135xf32>
    %242 = vector.extract_strided_slice %5 {offsets = [0, 46], sizes = [6, 1], strides = [1, 1]} : vector<6x98xf32> to vector<6x1xf32>
    %243 = vector.extract_strided_slice %10 {offsets = [0, 94], sizes = [6, 135], strides = [1, 1]} : vector<6x462xf32> to vector<6x135xf32>
    %244 = vector.broadcast %242 : vector<6x1xf32> to vector<6x135xf32>
    %245 = arith.mulf %244, %243 : vector<6x135xf32>
    %246 = arith.addf %241, %245 : vector<6x135xf32>
    %247 = vector.extract_strided_slice %5 {offsets = [0, 47], sizes = [6, 1], strides = [1, 1]} : vector<6x98xf32> to vector<6x1xf32>
    %248 = vector.extract_strided_slice %10 {offsets = [0, 95], sizes = [6, 135], strides = [1, 1]} : vector<6x462xf32> to vector<6x135xf32>
    %249 = vector.broadcast %247 : vector<6x1xf32> to vector<6x135xf32>
    %250 = arith.mulf %249, %248 : vector<6x135xf32>
    %251 = arith.addf %246, %250 : vector<6x135xf32>
    %252 = vector.extract_strided_slice %5 {offsets = [0, 48], sizes = [6, 1], strides = [1, 1]} : vector<6x98xf32> to vector<6x1xf32>
    %253 = vector.extract_strided_slice %10 {offsets = [0, 96], sizes = [6, 135], strides = [1, 1]} : vector<6x462xf32> to vector<6x135xf32>
    %254 = vector.broadcast %252 : vector<6x1xf32> to vector<6x135xf32>
    %255 = arith.mulf %254, %253 : vector<6x135xf32>
    %256 = arith.addf %251, %255 : vector<6x135xf32>
    %257 = vector.extract_strided_slice %256 {offsets = [0, 0], sizes = [1, 135], strides = [1, 1]} : vector<6x135xf32> to vector<1x135xf32>
    %258 = vector.extract_strided_slice %256 {offsets = [1, 0], sizes = [1, 135], strides = [1, 1]} : vector<6x135xf32> to vector<1x135xf32>
    %259 = arith.addf %257, %258 : vector<1x135xf32>
    %c0_11 = arith.constant 0 : index
    %c0_12 = arith.constant 0 : index
    %c0_13 = arith.constant 0 : index
    %260 = vector.load %arg4[%c0_11, %c0_12, %c0_13] : memref<1x6x135xf32, #tpu.memory_space<vmem>>, vector<1x1x135xf32>
    %261 = vector.shape_cast %260 : vector<1x1x135xf32> to vector<1x135xf32>
    %262 = vector.shape_cast %259 : vector<1x135xf32> to vector<1x1x135xf32>
    tpu.vector_store %arg4[%c0_11, %c0_12, %c0_13], %262 {strides = array<i32>} : memref<1x6x135xf32, #tpu.memory_space<vmem>>, vector<1x1x135xf32>,
    %263 = vector.extract_strided_slice %256 {offsets = [2, 0], sizes = [1, 135], strides = [1, 1]} : vector<6x135xf32> to vector<1x135xf32>
    %264 = vector.extract_strided_slice %256 {offsets = [3, 0], sizes = [1, 135], strides = [1, 1]} : vector<6x135xf32> to vector<1x135xf32>
    %265 = arith.addf %263, %264 : vector<1x135xf32>
    %c0_14 = arith.constant 0 : index
    %c1 = arith.constant 1 : index
    %c0_15 = arith.constant 0 : index
    %266 = vector.load %arg4[%c0_14, %c1, %c0_15] : memref<1x6x135xf32, #tpu.memory_space<vmem>>, vector<1x1x135xf32>
    %267 = vector.shape_cast %266 : vector<1x1x135xf32> to vector<1x135xf32>
    %268 = vector.shape_cast %265 : vector<1x135xf32> to vector<1x1x135xf32>
    tpu.vector_store %arg4[%c0_14, %c1, %c0_15], %268 {strides = array<i32>} : memref<1x6x135xf32, #tpu.memory_space<vmem>>, vector<1x1x135xf32>,
    %269 = vector.extract_strided_slice %256 {offsets = [4, 0], sizes = [1, 135], strides = [1, 1]} : vector<6x135xf32> to vector<1x135xf32>
    %270 = vector.extract_strided_slice %256 {offsets = [5, 0], sizes = [1, 135], strides = [1, 1]} : vector<6x135xf32> to vector<1x135xf32>
    %271 = arith.addf %269, %270 : vector<1x135xf32>
    %c0_16 = arith.constant 0 : index
    %c2 = arith.constant 2 : index
    %c0_17 = arith.constant 0 : index
    %272 = vector.load %arg4[%c0_16, %c2, %c0_17] : memref<1x6x135xf32, #tpu.memory_space<vmem>>, vector<1x1x135xf32>
    %273 = vector.shape_cast %272 : vector<1x1x135xf32> to vector<1x135xf32>
    %274 = vector.shape_cast %271 : vector<1x135xf32> to vector<1x1x135xf32>
    tpu.vector_store %arg4[%c0_16, %c2, %c0_17], %274 {strides = array<i32>} : memref<1x6x135xf32, #tpu.memory_space<vmem>>, vector<1x1x135xf32>,
    %cst_18 = arith.constant 0.000000e+00 : f32
    %275 = vector.broadcast %cst_18 : f32 to vector<6x135xf32>
    %276 = vector.extract_strided_slice %5 {offsets = [0, 49], sizes = [6, 1], strides = [1, 1]} : vector<6x98xf32> to vector<6x1xf32>
    %277 = vector.extract_strided_slice %10 {offsets = [0, 231], sizes = [6, 135], strides = [1, 1]} : vector<6x462xf32> to vector<6x135xf32>
    %278 = vector.broadcast %276 : vector<6x1xf32> to vector<6x135xf32>
    %279 = arith.mulf %278, %277 : vector<6x135xf32>
    %280 = arith.addf %275, %279 : vector<6x135xf32>
    %281 = vector.extract_strided_slice %5 {offsets = [0, 50], sizes = [6, 1], strides = [1, 1]} : vector<6x98xf32> to vector<6x1xf32>
    %282 = vector.extract_strided_slice %10 {offsets = [0, 232], sizes = [6, 135], strides = [1, 1]} : vector<6x462xf32> to vector<6x135xf32>
    %283 = vector.broadcast %281 : vector<6x1xf32> to vector<6x135xf32>
    %284 = arith.mulf %283, %282 : vector<6x135xf32>
    %285 = arith.addf %280, %284 : vector<6x135xf32>
    %286 = vector.extract_strided_slice %5 {offsets = [0, 51], sizes = [6, 1], strides = [1, 1]} : vector<6x98xf32> to vector<6x1xf32>
    %287 = vector.extract_strided_slice %10 {offsets = [0, 233], sizes = [6, 135], strides = [1, 1]} : vector<6x462xf32> to vector<6x135xf32>
    %288 = vector.broadcast %286 : vector<6x1xf32> to vector<6x135xf32>
    %289 = arith.mulf %288, %287 : vector<6x135xf32>
    %290 = arith.addf %285, %289 : vector<6x135xf32>
    %291 = vector.extract_strided_slice %5 {offsets = [0, 52], sizes = [6, 1], strides = [1, 1]} : vector<6x98xf32> to vector<6x1xf32>
    %292 = vector.extract_strided_slice %10 {offsets = [0, 234], sizes = [6, 135], strides = [1, 1]} : vector<6x462xf32> to vector<6x135xf32>
    %293 = vector.broadcast %291 : vector<6x1xf32> to vector<6x135xf32>
    %294 = arith.mulf %293, %292 : vector<6x135xf32>
    %295 = arith.addf %290, %294 : vector<6x135xf32>
    %296 = vector.extract_strided_slice %5 {offsets = [0, 53], sizes = [6, 1], strides = [1, 1]} : vector<6x98xf32> to vector<6x1xf32>
    %297 = vector.extract_strided_slice %10 {offsets = [0, 235], sizes = [6, 135], strides = [1, 1]} : vector<6x462xf32> to vector<6x135xf32>
    %298 = vector.broadcast %296 : vector<6x1xf32> to vector<6x135xf32>
    %299 = arith.mulf %298, %297 : vector<6x135xf32>
    %300 = arith.addf %295, %299 : vector<6x135xf32>
    %301 = vector.extract_strided_slice %5 {offsets = [0, 54], sizes = [6, 1], strides = [1, 1]} : vector<6x98xf32> to vector<6x1xf32>
    %302 = vector.extract_strided_slice %10 {offsets = [0, 236], sizes = [6, 135], strides = [1, 1]} : vector<6x462xf32> to vector<6x135xf32>
    %303 = vector.broadcast %301 : vector<6x1xf32> to vector<6x135xf32>
    %304 = arith.mulf %303, %302 : vector<6x135xf32>
    %305 = arith.addf %300, %304 : vector<6x135xf32>
    %306 = vector.extract_strided_slice %5 {offsets = [0, 55], sizes = [6, 1], strides = [1, 1]} : vector<6x98xf32> to vector<6x1xf32>
    %307 = vector.extract_strided_slice %10 {offsets = [0, 237], sizes = [6, 135], strides = [1, 1]} : vector<6x462xf32> to vector<6x135xf32>
    %308 = vector.broadcast %306 : vector<6x1xf32> to vector<6x135xf32>
    %309 = arith.mulf %308, %307 : vector<6x135xf32>
    %310 = arith.addf %305, %309 : vector<6x135xf32>
    %311 = vector.extract_strided_slice %5 {offsets = [0, 56], sizes = [6, 1], strides = [1, 1]} : vector<6x98xf32> to vector<6x1xf32>
    %312 = vector.extract_strided_slice %10 {offsets = [0, 246], sizes = [6, 135], strides = [1, 1]} : vector<6x462xf32> to vector<6x135xf32>
    %313 = vector.broadcast %311 : vector<6x1xf32> to vector<6x135xf32>
    %314 = arith.mulf %313, %312 : vector<6x135xf32>
    %315 = arith.addf %310, %314 : vector<6x135xf32>
    %316 = vector.extract_strided_slice %5 {offsets = [0, 57], sizes = [6, 1], strides = [1, 1]} : vector<6x98xf32> to vector<6x1xf32>
    %317 = vector.extract_strided_slice %10 {offsets = [0, 247], sizes = [6, 135], strides = [1, 1]} : vector<6x462xf32> to vector<6x135xf32>
    %318 = vector.broadcast %316 : vector<6x1xf32> to vector<6x135xf32>
    %319 = arith.mulf %318, %317 : vector<6x135xf32>
    %320 = arith.addf %315, %319 : vector<6x135xf32>
    %321 = vector.extract_strided_slice %5 {offsets = [0, 58], sizes = [6, 1], strides = [1, 1]} : vector<6x98xf32> to vector<6x1xf32>
    %322 = vector.extract_strided_slice %10 {offsets = [0, 248], sizes = [6, 135], strides = [1, 1]} : vector<6x462xf32> to vector<6x135xf32>
    %323 = vector.broadcast %321 : vector<6x1xf32> to vector<6x135xf32>
    %324 = arith.mulf %323, %322 : vector<6x135xf32>
    %325 = arith.addf %320, %324 : vector<6x135xf32>
    %326 = vector.extract_strided_slice %5 {offsets = [0, 59], sizes = [6, 1], strides = [1, 1]} : vector<6x98xf32> to vector<6x1xf32>
    %327 = vector.extract_strided_slice %10 {offsets = [0, 249], sizes = [6, 135], strides = [1, 1]} : vector<6x462xf32> to vector<6x135xf32>
    %328 = vector.broadcast %326 : vector<6x1xf32> to vector<6x135xf32>
    %329 = arith.mulf %328, %327 : vector<6x135xf32>
    %330 = arith.addf %325, %329 : vector<6x135xf32>
    %331 = vector.extract_strided_slice %5 {offsets = [0, 60], sizes = [6, 1], strides = [1, 1]} : vector<6x98xf32> to vector<6x1xf32>
    %332 = vector.extract_strided_slice %10 {offsets = [0, 250], sizes = [6, 135], strides = [1, 1]} : vector<6x462xf32> to vector<6x135xf32>
    %333 = vector.broadcast %331 : vector<6x1xf32> to vector<6x135xf32>
    %334 = arith.mulf %333, %332 : vector<6x135xf32>
    %335 = arith.addf %330, %334 : vector<6x135xf32>
    %336 = vector.extract_strided_slice %5 {offsets = [0, 61], sizes = [6, 1], strides = [1, 1]} : vector<6x98xf32> to vector<6x1xf32>
    %337 = vector.extract_strided_slice %10 {offsets = [0, 251], sizes = [6, 135], strides = [1, 1]} : vector<6x462xf32> to vector<6x135xf32>
    %338 = vector.broadcast %336 : vector<6x1xf32> to vector<6x135xf32>
    %339 = arith.mulf %338, %337 : vector<6x135xf32>
    %340 = arith.addf %335, %339 : vector<6x135xf32>
    %341 = vector.extract_strided_slice %5 {offsets = [0, 62], sizes = [6, 1], strides = [1, 1]} : vector<6x98xf32> to vector<6x1xf32>
    %342 = vector.extract_strided_slice %10 {offsets = [0, 252], sizes = [6, 135], strides = [1, 1]} : vector<6x462xf32> to vector<6x135xf32>
    %343 = vector.broadcast %341 : vector<6x1xf32> to vector<6x135xf32>
    %344 = arith.mulf %343, %342 : vector<6x135xf32>
    %345 = arith.addf %340, %344 : vector<6x135xf32>
    %346 = vector.extract_strided_slice %5 {offsets = [0, 63], sizes = [6, 1], strides = [1, 1]} : vector<6x98xf32> to vector<6x1xf32>
    %347 = vector.extract_strided_slice %10 {offsets = [0, 261], sizes = [6, 135], strides = [1, 1]} : vector<6x462xf32> to vector<6x135xf32>
    %348 = vector.broadcast %346 : vector<6x1xf32> to vector<6x135xf32>
    %349 = arith.mulf %348, %347 : vector<6x135xf32>
    %350 = arith.addf %345, %349 : vector<6x135xf32>
    %351 = vector.extract_strided_slice %5 {offsets = [0, 64], sizes = [6, 1], strides = [1, 1]} : vector<6x98xf32> to vector<6x1xf32>
    %352 = vector.extract_strided_slice %10 {offsets = [0, 262], sizes = [6, 135], strides = [1, 1]} : vector<6x462xf32> to vector<6x135xf32>
    %353 = vector.broadcast %351 : vector<6x1xf32> to vector<6x135xf32>
    %354 = arith.mulf %353, %352 : vector<6x135xf32>
    %355 = arith.addf %350, %354 : vector<6x135xf32>
    %356 = vector.extract_strided_slice %5 {offsets = [0, 65], sizes = [6, 1], strides = [1, 1]} : vector<6x98xf32> to vector<6x1xf32>
    %357 = vector.extract_strided_slice %10 {offsets = [0, 263], sizes = [6, 135], strides = [1, 1]} : vector<6x462xf32> to vector<6x135xf32>
    %358 = vector.broadcast %356 : vector<6x1xf32> to vector<6x135xf32>
    %359 = arith.mulf %358, %357 : vector<6x135xf32>
    %360 = arith.addf %355, %359 : vector<6x135xf32>
    %361 = vector.extract_strided_slice %5 {offsets = [0, 66], sizes = [6, 1], strides = [1, 1]} : vector<6x98xf32> to vector<6x1xf32>
    %362 = vector.extract_strided_slice %10 {offsets = [0, 264], sizes = [6, 135], strides = [1, 1]} : vector<6x462xf32> to vector<6x135xf32>
    %363 = vector.broadcast %361 : vector<6x1xf32> to vector<6x135xf32>
    %364 = arith.mulf %363, %362 : vector<6x135xf32>
    %365 = arith.addf %360, %364 : vector<6x135xf32>
    %366 = vector.extract_strided_slice %5 {offsets = [0, 67], sizes = [6, 1], strides = [1, 1]} : vector<6x98xf32> to vector<6x1xf32>
    %367 = vector.extract_strided_slice %10 {offsets = [0, 265], sizes = [6, 135], strides = [1, 1]} : vector<6x462xf32> to vector<6x135xf32>
    %368 = vector.broadcast %366 : vector<6x1xf32> to vector<6x135xf32>
    %369 = arith.mulf %368, %367 : vector<6x135xf32>
    %370 = arith.addf %365, %369 : vector<6x135xf32>
    %371 = vector.extract_strided_slice %5 {offsets = [0, 68], sizes = [6, 1], strides = [1, 1]} : vector<6x98xf32> to vector<6x1xf32>
    %372 = vector.extract_strided_slice %10 {offsets = [0, 266], sizes = [6, 135], strides = [1, 1]} : vector<6x462xf32> to vector<6x135xf32>
    %373 = vector.broadcast %371 : vector<6x1xf32> to vector<6x135xf32>
    %374 = arith.mulf %373, %372 : vector<6x135xf32>
    %375 = arith.addf %370, %374 : vector<6x135xf32>
    %376 = vector.extract_strided_slice %5 {offsets = [0, 69], sizes = [6, 1], strides = [1, 1]} : vector<6x98xf32> to vector<6x1xf32>
    %377 = vector.extract_strided_slice %10 {offsets = [0, 267], sizes = [6, 135], strides = [1, 1]} : vector<6x462xf32> to vector<6x135xf32>
    %378 = vector.broadcast %376 : vector<6x1xf32> to vector<6x135xf32>
    %379 = arith.mulf %378, %377 : vector<6x135xf32>
    %380 = arith.addf %375, %379 : vector<6x135xf32>
    %381 = vector.extract_strided_slice %5 {offsets = [0, 70], sizes = [6, 1], strides = [1, 1]} : vector<6x98xf32> to vector<6x1xf32>
    %382 = vector.extract_strided_slice %10 {offsets = [0, 276], sizes = [6, 135], strides = [1, 1]} : vector<6x462xf32> to vector<6x135xf32>
    %383 = vector.broadcast %381 : vector<6x1xf32> to vector<6x135xf32>
    %384 = arith.mulf %383, %382 : vector<6x135xf32>
    %385 = arith.addf %380, %384 : vector<6x135xf32>
    %386 = vector.extract_strided_slice %5 {offsets = [0, 71], sizes = [6, 1], strides = [1, 1]} : vector<6x98xf32> to vector<6x1xf32>
    %387 = vector.extract_strided_slice %10 {offsets = [0, 277], sizes = [6, 135], strides = [1, 1]} : vector<6x462xf32> to vector<6x135xf32>
    %388 = vector.broadcast %386 : vector<6x1xf32> to vector<6x135xf32>
    %389 = arith.mulf %388, %387 : vector<6x135xf32>
    %390 = arith.addf %385, %389 : vector<6x135xf32>
    %391 = vector.extract_strided_slice %5 {offsets = [0, 72], sizes = [6, 1], strides = [1, 1]} : vector<6x98xf32> to vector<6x1xf32>
    %392 = vector.extract_strided_slice %10 {offsets = [0, 278], sizes = [6, 135], strides = [1, 1]} : vector<6x462xf32> to vector<6x135xf32>
    %393 = vector.broadcast %391 : vector<6x1xf32> to vector<6x135xf32>
    %394 = arith.mulf %393, %392 : vector<6x135xf32>
    %395 = arith.addf %390, %394 : vector<6x135xf32>
    %396 = vector.extract_strided_slice %5 {offsets = [0, 73], sizes = [6, 1], strides = [1, 1]} : vector<6x98xf32> to vector<6x1xf32>
    %397 = vector.extract_strided_slice %10 {offsets = [0, 279], sizes = [6, 135], strides = [1, 1]} : vector<6x462xf32> to vector<6x135xf32>
    %398 = vector.broadcast %396 : vector<6x1xf32> to vector<6x135xf32>
    %399 = arith.mulf %398, %397 : vector<6x135xf32>
    %400 = arith.addf %395, %399 : vector<6x135xf32>
    %401 = vector.extract_strided_slice %5 {offsets = [0, 74], sizes = [6, 1], strides = [1, 1]} : vector<6x98xf32> to vector<6x1xf32>
    %402 = vector.extract_strided_slice %10 {offsets = [0, 280], sizes = [6, 135], strides = [1, 1]} : vector<6x462xf32> to vector<6x135xf32>
    %403 = vector.broadcast %401 : vector<6x1xf32> to vector<6x135xf32>
    %404 = arith.mulf %403, %402 : vector<6x135xf32>
    %405 = arith.addf %400, %404 : vector<6x135xf32>
    %406 = vector.extract_strided_slice %5 {offsets = [0, 75], sizes = [6, 1], strides = [1, 1]} : vector<6x98xf32> to vector<6x1xf32>
    %407 = vector.extract_strided_slice %10 {offsets = [0, 281], sizes = [6, 135], strides = [1, 1]} : vector<6x462xf32> to vector<6x135xf32>
    %408 = vector.broadcast %406 : vector<6x1xf32> to vector<6x135xf32>
    %409 = arith.mulf %408, %407 : vector<6x135xf32>
    %410 = arith.addf %405, %409 : vector<6x135xf32>
    %411 = vector.extract_strided_slice %5 {offsets = [0, 76], sizes = [6, 1], strides = [1, 1]} : vector<6x98xf32> to vector<6x1xf32>
    %412 = vector.extract_strided_slice %10 {offsets = [0, 282], sizes = [6, 135], strides = [1, 1]} : vector<6x462xf32> to vector<6x135xf32>
    %413 = vector.broadcast %411 : vector<6x1xf32> to vector<6x135xf32>
    %414 = arith.mulf %413, %412 : vector<6x135xf32>
    %415 = arith.addf %410, %414 : vector<6x135xf32>
    %416 = vector.extract_strided_slice %5 {offsets = [0, 77], sizes = [6, 1], strides = [1, 1]} : vector<6x98xf32> to vector<6x1xf32>
    %417 = vector.extract_strided_slice %10 {offsets = [0, 291], sizes = [6, 135], strides = [1, 1]} : vector<6x462xf32> to vector<6x135xf32>
    %418 = vector.broadcast %416 : vector<6x1xf32> to vector<6x135xf32>
    %419 = arith.mulf %418, %417 : vector<6x135xf32>
    %420 = arith.addf %415, %419 : vector<6x135xf32>
    %421 = vector.extract_strided_slice %5 {offsets = [0, 78], sizes = [6, 1], strides = [1, 1]} : vector<6x98xf32> to vector<6x1xf32>
    %422 = vector.extract_strided_slice %10 {offsets = [0, 292], sizes = [6, 135], strides = [1, 1]} : vector<6x462xf32> to vector<6x135xf32>
    %423 = vector.broadcast %421 : vector<6x1xf32> to vector<6x135xf32>
    %424 = arith.mulf %423, %422 : vector<6x135xf32>
    %425 = arith.addf %420, %424 : vector<6x135xf32>
    %426 = vector.extract_strided_slice %5 {offsets = [0, 79], sizes = [6, 1], strides = [1, 1]} : vector<6x98xf32> to vector<6x1xf32>
    %427 = vector.extract_strided_slice %10 {offsets = [0, 293], sizes = [6, 135], strides = [1, 1]} : vector<6x462xf32> to vector<6x135xf32>
    %428 = vector.broadcast %426 : vector<6x1xf32> to vector<6x135xf32>
    %429 = arith.mulf %428, %427 : vector<6x135xf32>
    %430 = arith.addf %425, %429 : vector<6x135xf32>
    %431 = vector.extract_strided_slice %5 {offsets = [0, 80], sizes = [6, 1], strides = [1, 1]} : vector<6x98xf32> to vector<6x1xf32>
    %432 = vector.extract_strided_slice %10 {offsets = [0, 294], sizes = [6, 135], strides = [1, 1]} : vector<6x462xf32> to vector<6x135xf32>
    %433 = vector.broadcast %431 : vector<6x1xf32> to vector<6x135xf32>
    %434 = arith.mulf %433, %432 : vector<6x135xf32>
    %435 = arith.addf %430, %434 : vector<6x135xf32>
    %436 = vector.extract_strided_slice %5 {offsets = [0, 81], sizes = [6, 1], strides = [1, 1]} : vector<6x98xf32> to vector<6x1xf32>
    %437 = vector.extract_strided_slice %10 {offsets = [0, 295], sizes = [6, 135], strides = [1, 1]} : vector<6x462xf32> to vector<6x135xf32>
    %438 = vector.broadcast %436 : vector<6x1xf32> to vector<6x135xf32>
    %439 = arith.mulf %438, %437 : vector<6x135xf32>
    %440 = arith.addf %435, %439 : vector<6x135xf32>
    %441 = vector.extract_strided_slice %5 {offsets = [0, 82], sizes = [6, 1], strides = [1, 1]} : vector<6x98xf32> to vector<6x1xf32>
    %442 = vector.extract_strided_slice %10 {offsets = [0, 296], sizes = [6, 135], strides = [1, 1]} : vector<6x462xf32> to vector<6x135xf32>
    %443 = vector.broadcast %441 : vector<6x1xf32> to vector<6x135xf32>
    %444 = arith.mulf %443, %442 : vector<6x135xf32>
    %445 = arith.addf %440, %444 : vector<6x135xf32>
    %446 = vector.extract_strided_slice %5 {offsets = [0, 83], sizes = [6, 1], strides = [1, 1]} : vector<6x98xf32> to vector<6x1xf32>
    %447 = vector.extract_strided_slice %10 {offsets = [0, 297], sizes = [6, 135], strides = [1, 1]} : vector<6x462xf32> to vector<6x135xf32>
    %448 = vector.broadcast %446 : vector<6x1xf32> to vector<6x135xf32>
    %449 = arith.mulf %448, %447 : vector<6x135xf32>
    %450 = arith.addf %445, %449 : vector<6x135xf32>
    %451 = vector.extract_strided_slice %5 {offsets = [0, 84], sizes = [6, 1], strides = [1, 1]} : vector<6x98xf32> to vector<6x1xf32>
    %452 = vector.extract_strided_slice %10 {offsets = [0, 306], sizes = [6, 135], strides = [1, 1]} : vector<6x462xf32> to vector<6x135xf32>
    %453 = vector.broadcast %451 : vector<6x1xf32> to vector<6x135xf32>
    %454 = arith.mulf %453, %452 : vector<6x135xf32>
    %455 = arith.addf %450, %454 : vector<6x135xf32>
    %456 = vector.extract_strided_slice %5 {offsets = [0, 85], sizes = [6, 1], strides = [1, 1]} : vector<6x98xf32> to vector<6x1xf32>
    %457 = vector.extract_strided_slice %10 {offsets = [0, 307], sizes = [6, 135], strides = [1, 1]} : vector<6x462xf32> to vector<6x135xf32>
    %458 = vector.broadcast %456 : vector<6x1xf32> to vector<6x135xf32>
    %459 = arith.mulf %458, %457 : vector<6x135xf32>
    %460 = arith.addf %455, %459 : vector<6x135xf32>
    %461 = vector.extract_strided_slice %5 {offsets = [0, 86], sizes = [6, 1], strides = [1, 1]} : vector<6x98xf32> to vector<6x1xf32>
    %462 = vector.extract_strided_slice %10 {offsets = [0, 308], sizes = [6, 135], strides = [1, 1]} : vector<6x462xf32> to vector<6x135xf32>
    %463 = vector.broadcast %461 : vector<6x1xf32> to vector<6x135xf32>
    %464 = arith.mulf %463, %462 : vector<6x135xf32>
    %465 = arith.addf %460, %464 : vector<6x135xf32>
    %466 = vector.extract_strided_slice %5 {offsets = [0, 87], sizes = [6, 1], strides = [1, 1]} : vector<6x98xf32> to vector<6x1xf32>
    %467 = vector.extract_strided_slice %10 {offsets = [0, 309], sizes = [6, 135], strides = [1, 1]} : vector<6x462xf32> to vector<6x135xf32>
    %468 = vector.broadcast %466 : vector<6x1xf32> to vector<6x135xf32>
    %469 = arith.mulf %468, %467 : vector<6x135xf32>
    %470 = arith.addf %465, %469 : vector<6x135xf32>
    %471 = vector.extract_strided_slice %5 {offsets = [0, 88], sizes = [6, 1], strides = [1, 1]} : vector<6x98xf32> to vector<6x1xf32>
    %472 = vector.extract_strided_slice %10 {offsets = [0, 310], sizes = [6, 135], strides = [1, 1]} : vector<6x462xf32> to vector<6x135xf32>
    %473 = vector.broadcast %471 : vector<6x1xf32> to vector<6x135xf32>
    %474 = arith.mulf %473, %472 : vector<6x135xf32>
    %475 = arith.addf %470, %474 : vector<6x135xf32>
    %476 = vector.extract_strided_slice %5 {offsets = [0, 89], sizes = [6, 1], strides = [1, 1]} : vector<6x98xf32> to vector<6x1xf32>
    %477 = vector.extract_strided_slice %10 {offsets = [0, 311], sizes = [6, 135], strides = [1, 1]} : vector<6x462xf32> to vector<6x135xf32>
    %478 = vector.broadcast %476 : vector<6x1xf32> to vector<6x135xf32>
    %479 = arith.mulf %478, %477 : vector<6x135xf32>
    %480 = arith.addf %475, %479 : vector<6x135xf32>
    %481 = vector.extract_strided_slice %5 {offsets = [0, 90], sizes = [6, 1], strides = [1, 1]} : vector<6x98xf32> to vector<6x1xf32>
    %482 = vector.extract_strided_slice %10 {offsets = [0, 312], sizes = [6, 135], strides = [1, 1]} : vector<6x462xf32> to vector<6x135xf32>
    %483 = vector.broadcast %481 : vector<6x1xf32> to vector<6x135xf32>
    %484 = arith.mulf %483, %482 : vector<6x135xf32>
    %485 = arith.addf %480, %484 : vector<6x135xf32>
    %486 = vector.extract_strided_slice %5 {offsets = [0, 91], sizes = [6, 1], strides = [1, 1]} : vector<6x98xf32> to vector<6x1xf32>
    %487 = vector.extract_strided_slice %10 {offsets = [0, 321], sizes = [6, 135], strides = [1, 1]} : vector<6x462xf32> to vector<6x135xf32>
    %488 = vector.broadcast %486 : vector<6x1xf32> to vector<6x135xf32>
    %489 = arith.mulf %488, %487 : vector<6x135xf32>
    %490 = arith.addf %485, %489 : vector<6x135xf32>
    %491 = vector.extract_strided_slice %5 {offsets = [0, 92], sizes = [6, 1], strides = [1, 1]} : vector<6x98xf32> to vector<6x1xf32>
    %492 = vector.extract_strided_slice %10 {offsets = [0, 322], sizes = [6, 135], strides = [1, 1]} : vector<6x462xf32> to vector<6x135xf32>
    %493 = vector.broadcast %491 : vector<6x1xf32> to vector<6x135xf32>
    %494 = arith.mulf %493, %492 : vector<6x135xf32>
    %495 = arith.addf %490, %494 : vector<6x135xf32>
    %496 = vector.extract_strided_slice %5 {offsets = [0, 93], sizes = [6, 1], strides = [1, 1]} : vector<6x98xf32> to vector<6x1xf32>
    %497 = vector.extract_strided_slice %10 {offsets = [0, 323], sizes = [6, 135], strides = [1, 1]} : vector<6x462xf32> to vector<6x135xf32>
    %498 = vector.broadcast %496 : vector<6x1xf32> to vector<6x135xf32>
    %499 = arith.mulf %498, %497 : vector<6x135xf32>
    %500 = arith.addf %495, %499 : vector<6x135xf32>
    %501 = vector.extract_strided_slice %5 {offsets = [0, 94], sizes = [6, 1], strides = [1, 1]} : vector<6x98xf32> to vector<6x1xf32>
    %502 = vector.extract_strided_slice %10 {offsets = [0, 324], sizes = [6, 135], strides = [1, 1]} : vector<6x462xf32> to vector<6x135xf32>
    %503 = vector.broadcast %501 : vector<6x1xf32> to vector<6x135xf32>
    %504 = arith.mulf %503, %502 : vector<6x135xf32>
    %505 = arith.addf %500, %504 : vector<6x135xf32>
    %506 = vector.extract_strided_slice %5 {offsets = [0, 95], sizes = [6, 1], strides = [1, 1]} : vector<6x98xf32> to vector<6x1xf32>
    %507 = vector.extract_strided_slice %10 {offsets = [0, 325], sizes = [6, 135], strides = [1, 1]} : vector<6x462xf32> to vector<6x135xf32>
    %508 = vector.broadcast %506 : vector<6x1xf32> to vector<6x135xf32>
    %509 = arith.mulf %508, %507 : vector<6x135xf32>
    %510 = arith.addf %505, %509 : vector<6x135xf32>
    %511 = vector.extract_strided_slice %5 {offsets = [0, 96], sizes = [6, 1], strides = [1, 1]} : vector<6x98xf32> to vector<6x1xf32>
    %512 = vector.extract_strided_slice %10 {offsets = [0, 326], sizes = [6, 135], strides = [1, 1]} : vector<6x462xf32> to vector<6x135xf32>
    %513 = vector.broadcast %511 : vector<6x1xf32> to vector<6x135xf32>
    %514 = arith.mulf %513, %512 : vector<6x135xf32>
    %515 = arith.addf %510, %514 : vector<6x135xf32>
    %516 = vector.extract_strided_slice %5 {offsets = [0, 97], sizes = [6, 1], strides = [1, 1]} : vector<6x98xf32> to vector<6x1xf32>
    %517 = vector.extract_strided_slice %10 {offsets = [0, 327], sizes = [6, 135], strides = [1, 1]} : vector<6x462xf32> to vector<6x135xf32>
    %518 = vector.broadcast %516 : vector<6x1xf32> to vector<6x135xf32>
    %519 = arith.mulf %518, %517 : vector<6x135xf32>
    %520 = arith.addf %515, %519 : vector<6x135xf32>
    %521 = vector.extract_strided_slice %520 {offsets = [0, 0], sizes = [1, 135], strides = [1, 1]} : vector<6x135xf32> to vector<1x135xf32>
    %522 = vector.extract_strided_slice %520 {offsets = [1, 0], sizes = [1, 135], strides = [1, 1]} : vector<6x135xf32> to vector<1x135xf32>
    %523 = arith.addf %521, %522 : vector<1x135xf32>
    %c0_19 = arith.constant 0 : index
    %c3 = arith.constant 3 : index
    %c0_20 = arith.constant 0 : index
    %524 = vector.load %arg4[%c0_19, %c3, %c0_20] : memref<1x6x135xf32, #tpu.memory_space<vmem>>, vector<1x1x135xf32>
    %525 = vector.shape_cast %524 : vector<1x1x135xf32> to vector<1x135xf32>
    %526 = vector.shape_cast %523 : vector<1x135xf32> to vector<1x1x135xf32>
    tpu.vector_store %arg4[%c0_19, %c3, %c0_20], %526 {strides = array<i32>} : memref<1x6x135xf32, #tpu.memory_space<vmem>>, vector<1x1x135xf32>,
    %527 = vector.extract_strided_slice %520 {offsets = [2, 0], sizes = [1, 135], strides = [1, 1]} : vector<6x135xf32> to vector<1x135xf32>
    %528 = vector.extract_strided_slice %520 {offsets = [3, 0], sizes = [1, 135], strides = [1, 1]} : vector<6x135xf32> to vector<1x135xf32>
    %529 = arith.addf %527, %528 : vector<1x135xf32>
    %c0_21 = arith.constant 0 : index
    %c4 = arith.constant 4 : index
    %c0_22 = arith.constant 0 : index
    %530 = vector.load %arg4[%c0_21, %c4, %c0_22] : memref<1x6x135xf32, #tpu.memory_space<vmem>>, vector<1x1x135xf32>
    %531 = vector.shape_cast %530 : vector<1x1x135xf32> to vector<1x135xf32>
    %532 = vector.shape_cast %529 : vector<1x135xf32> to vector<1x1x135xf32>
    tpu.vector_store %arg4[%c0_21, %c4, %c0_22], %532 {strides = array<i32>} : memref<1x6x135xf32, #tpu.memory_space<vmem>>, vector<1x1x135xf32>,
    %533 = vector.extract_strided_slice %520 {offsets = [4, 0], sizes = [1, 135], strides = [1, 1]} : vector<6x135xf32> to vector<1x135xf32>
    %534 = vector.extract_strided_slice %520 {offsets = [5, 0], sizes = [1, 135], strides = [1, 1]} : vector<6x135xf32> to vector<1x135xf32>
    %535 = arith.addf %533, %534 : vector<1x135xf32>
    %c0_23 = arith.constant 0 : index
    %c5 = arith.constant 5 : index
    %c0_24 = arith.constant 0 : index
    %536 = vector.load %arg4[%c0_23, %c5, %c0_24] : memref<1x6x135xf32, #tpu.memory_space<vmem>>, vector<1x1x135xf32>
    %537 = vector.shape_cast %536 : vector<1x1x135xf32> to vector<1x135xf32>
    %538 = vector.shape_cast %535 : vector<1x135xf32> to vector<1x1x135xf32>
    tpu.vector_store %arg4[%c0_23, %c5, %c0_24], %538 {strides = array<i32>} : memref<1x6x135xf32, #tpu.memory_space<vmem>>, vector<1x1x135xf32>,
    return
  }
  func.func @transform_0(%arg0: i32) -> (i32, i32, i32) {
    %c0_i32 = arith.constant 0 : i32
    %c0_i32_0 = arith.constant 0 : i32
    %c0_i32_1 = arith.constant 0 : i32
    return %arg0, %c0_i32, %c0_i32_0 : i32, i32, i32
  }
  func.func @transform_1(%arg0: i32) -> (i32, i32, i32) {
    %c0_i32 = arith.constant 0 : i32
    %c0_i32_0 = arith.constant 0 : i32
    %c0_i32_1 = arith.constant 0 : i32
    return %arg0, %c0_i32, %c0_i32_0 : i32, i32, i32
  }
  func.func @transform_2(%arg0: i32) -> (i32, i32) {
    %c0_i32 = arith.constant 0 : i32
    %c0_i32_0 = arith.constant 0 : i32
    %c0_i32_1 = arith.constant 0 : i32
    return %c0_i32, %c0_i32_0 : i32, i32
  }
  func.func @transform_3(%arg0: i32) -> (i32, i32, i32) {
    %c0_i32 = arith.constant 0 : i32
    %c0_i32_0 = arith.constant 0 : i32
    %c0_i32_1 = arith.constant 0 : i32
    return %arg0, %c0_i32, %c0_i32_0 : i32, i32, i32
  }
}

</mosaic_0001>

<llo_original>
// kernel: siamese_forward.1
$region0: #{siamese_forward.1}
  #allocation0 [shape = 'u32[]', space=smem, size = 0x4, offset = 0x4, fixed_abs, tag = 'smem constant byte address 0x4 - core index']
  #allocation1 [shape = 'u32[144,128]{1,0:T(1,128)}', space=vmem, size = 0x12000, scoped, tag = 'internal scratch']
  %s0 = inlined_call_operand.vmem [shape: f32[1,28,98], index: 0, kind: input, shape index: {}]
  %s1 = inlined_call_operand.vmem [shape: f32[1,28,462], index: 1, kind: input, shape index: {}]
  %s2 = inlined_call_operand.vmem [shape: f32[6,28], index: 2, kind: input, shape index: {}]
  %s3 = inlined_call_operand.vmem [shape: f32[1,6,135], index: 3, kind: output, shape index: {}]
  %s4 = sld [smem:[#allocation0]]
  $region22: #{siamese_forward.1} parent=0
    _
  %s6 = ssub.s32 1, %s4
  %s7 = scalar_select 0, %s6, %s4
  // Predicated region
  $region2: #{siamese_forward.1} parent=0 // pred_check
    _
  $region3: #{siamese_forward.1} parent=0 // pred_check_branch
    %9 = sbr.rel (0) target = $region5
  $region4: #{siamese_forward.1} parent=0 // pred_region
    _
  $region5: #{siamese_forward.1} parent=0 // pred_fallthru
    _
  // Predicated region
  $region6: #{siamese_forward.1} parent=0 // pred_check
    _
  $region7: #{siamese_forward.1} parent=0 // pred_check_branch
    %11 = sbr.rel (0) target = $region9
  $region8: #{siamese_forward.1} parent=0 // pred_region
    _
  $region9: #{siamese_forward.1} parent=0 // pred_fallthru
    _
  // Predicated region
  $region10: #{siamese_forward.1} parent=0 // pred_check
    _
  $region11: #{siamese_forward.1} parent=0 // pred_check_branch
    %13 = sbr.rel (0) target = $region13
  $region12: #{siamese_forward.1} parent=0 // pred_region
    _
  $region13: #{siamese_forward.1} parent=0 // pred_fallthru
    _
  %v14 = vld [vmem:[%s2] sm:$0x3f]
  %v15 = vld [vmem:[%s0] sm:$0xff]
  %v16 = vld [vmem:[%s0 + $0x8] sm:$0xff]
  %v17 = vld [vmem:[%s0 + $0x10] sm:$0xff]
  %v18 = vld [vmem:[%s0 + $0x18] sm:$0xf]
  %vm19 = vcmask 228352
  %v21 = vsel %vm19, %v14, 0
  %vm23 = vcmask 1043456
  %v25 = vsel %vm23, %v18, 0
  %27 = vmatprep.subr.mxu0 0.0
  %28 = vmatpush1.msra.mxu0 0.0
  %29 = vmatprep.subr.mxu0 0.0
  %30 = vmatpush1.msra.mxu0 0.0
  %31 = vmatprep.subr.mxu0 0.0
  %32 = vmatpush1.msra.mxu0 0.0
  %33 = vmatprep.subr.mxu0 0.0
  %34 = vmatpush1.msra.mxu0 0.0
  %35 = vmatprep.subr.mxu0 0.0
  %36 = vmatpush1.msra.mxu0 0.0
  %37 = vmatprep.subr.mxu0 0.0
  %38 = vmatpush1.msra.mxu0 0.0
  %39 = vmatprep.subr.mxu0 0.0
  %40 = vmatpush1.msra.mxu0 0.0
  %41 = vmatprep.subr.mxu0 0.0
  %42 = vmatpush1.msra.mxu0 0.0
  %43 = vmatprep.subr.mxu0 0.0
  %44 = vmatpush1.msra.mxu0 0.0
  %45 = vmatprep.subr.mxu0 0.0
  %46 = vmatpush1.msra.mxu0 0.0
  %47 = vmatprep.subr.mxu0 0.0
  %48 = vmatpush1.msra.mxu0 0.0
  %49 = vmatprep.subr.mxu0 0.0
  %50 = vmatpush1.msra.mxu0 0.0
  %51 = vmatprep.subr.mxu0 0.0
  %52 = vmatpush1.msra.mxu0 %v25
  %53 = vmatprep.subr.mxu0 0.0
  %54 = vmatpush1.msra.mxu0 %v17
  %55 = vmatprep.subr.mxu0 0.0
  %56 = vmatpush1.msra.mxu0 %v16
  %57 = vmatprep.subr.mxu0 0.0
  %58 = vmatpush1.msra.mxu0 %v15
  %59 = vmatprep.subr.mxu0 0.0
  %60 = vmatpush2.msra.mxu0 0.0
  %61 = vmatprep.subr.mxu0 0.0
  %62 = vmatpush2.msra.mxu0 0.0
  %63 = vmatprep.subr.mxu0 0.0
  %64 = vmatpush2.msra.mxu0 0.0
  %65 = vmatprep.subr.mxu0 0.0
  %66 = vmatpush2.msra.mxu0 0.0
  %67 = vmatprep.subr.mxu0 0.0
  %68 = vmatpush2.msra.mxu0 0.0
  %69 = vmatprep.subr.mxu0 0.0
  %70 = vmatpush2.msra.mxu0 0.0
  %71 = vmatprep.subr.mxu0 0.0
  %72 = vmatpush2.msra.mxu0 0.0
  %73 = vmatprep.subr.mxu0 0.0
  %74 = vmatpush2.msra.mxu0 0.0
  %75 = vmatprep.subr.mxu0 0.0
  %76 = vmatpush2.msra.mxu0 0.0
  %77 = vmatprep.subr.mxu0 0.0
  %78 = vmatpush2.msra.mxu0 0.0
  %79 = vmatprep.subr.mxu0 0.0
  %80 = vmatpush2.msra.mxu0 0.0
  %81 = vmatprep.subr.mxu0 0.0
  %82 = vmatpush2.msra.mxu0 0.0
  %83 = vmatprep.subr.mxu0 0.0
  %84 = vmatpush2.msra.mxu0 0.0
  %85 = vmatprep.subr.mxu0 0.0
  %86 = vmatpush2.msra.mxu0 0.0
  %87 = vmatprep.subr.mxu0 0.0
  %88 = vmatpush2.msra.mxu0 0.0
  %89 = vmatprep.subr.mxu0 0.0
  %90 = vmatpush2.msra.mxu0 0.0
  %91 = vmatprep.mubr.f32.mxu0 0.0
  %92 = vmatmul.mubr.f32.gmra.mxu0 %v21
  %v93 = vpop.f32.mrf.mxu0
  %v94 = vadd.f32 0.0, %v93
  %v95 = vpop.f32.mrf.mxu0
  %96 = vdwg.mxu0
  %v97 = vmax.f32 %v94, 0.0
  %v98 = vld [vmem:[%s1] sm:$0xff]
  %v99 = vld [vmem:[%s1 + $0x8] sm:$0xff]
  %v100 = vld [vmem:[%s1 + $0x10] sm:$0xff]
  %v101 = vld [vmem:[%s1 + $0x18] sm:$0xff]
  %v102 = vld [vmem:[%s1 + $0x20] sm:$0xff]
  %v103 = vld [vmem:[%s1 + $0x28] sm:$0xff]
  %v104 = vld [vmem:[%s1 + $0x30] sm:$0xff]
  %v105 = vld [vmem:[%s1 + $0x38] sm:$0xff]
  %v106 = vld [vmem:[%s1 + $0x40] sm:$0xff]
  %v107 = vld [vmem:[%s1 + $0x48] sm:$0xff]
  %v108 = vld [vmem:[%s1 + $0x50] sm:$0xff]
  %v109 = vld [vmem:[%s1 + $0x58] sm:$0xff]
  %v110 = vld [vmem:[%s1 + $0x60] sm:$0xf]
  %v111 = vld [vmem:[%s1 + $0x68] sm:$0xf]
  %v112 = vld [vmem:[%s1 + $0x70] sm:$0xf]
  %v113 = vld [vmem:[%s1 + $0x78] sm:$0xf]
  %v115 = vsel %vm23, %v110, 0
  %v118 = vsel %vm23, %v111, 0
  %v121 = vsel %vm23, %v112, 0
  %v124 = vsel %vm23, %v113, 0
  %126 = vmatprep.subr.mxu0 0.0
  %127 = vmatpush1.msra.mxu0 0.0
  %128 = vmatprep.subr.mxu0 0.0
  %129 = vmatpush1.msra.mxu0 0.0
  %130 = vmatprep.subr.mxu0 0.0
  %131 = vmatpush1.msra.mxu0 0.0
  %132 = vmatprep.subr.mxu0 0.0
  %133 = vmatpush1.msra.mxu0 0.0
  %134 = vmatprep.subr.mxu0 0.0
  %135 = vmatpush1.msra.mxu0 0.0
  %136 = vmatprep.subr.mxu0 0.0
  %137 = vmatpush1.msra.mxu0 0.0
  %138 = vmatprep.subr.mxu0 0.0
  %139 = vmatpush1.msra.mxu0 0.0
  %140 = vmatprep.subr.mxu0 0.0
  %141 = vmatpush1.msra.mxu0 0.0
  %142 = vmatprep.subr.mxu0 0.0
  %143 = vmatpush1.msra.mxu0 0.0
  %144 = vmatprep.subr.mxu0 0.0
  %145 = vmatpush1.msra.mxu0 0.0
  %146 = vmatprep.subr.mxu0 0.0
  %147 = vmatpush1.msra.mxu0 0.0
  %148 = vmatprep.subr.mxu0 0.0
  %149 = vmatpush1.msra.mxu0 0.0
  %150 = vmatprep.subr.mxu0 %v118
  %151 = vmatpush1.msra.mxu0 %v115
  %152 = vmatprep.subr.mxu0 %v107
  %153 = vmatpush1.msra.mxu0 %v106
  %154 = vmatprep.subr.mxu0 %v103
  %155 = vmatpush1.msra.mxu0 %v102
  %156 = vmatprep.subr.mxu0 %v99
  %157 = vmatpush1.msra.mxu0 %v98
  %158 = vmatprep.subr.mxu0 0.0
  %159 = vmatpush2.msra.mxu0 0.0
  %160 = vmatprep.subr.mxu0 0.0
  %161 = vmatpush2.msra.mxu0 0.0
  %162 = vmatprep.subr.mxu0 0.0
  %163 = vmatpush2.msra.mxu0 0.0
  %164 = vmatprep.subr.mxu0 0.0
  %165 = vmatpush2.msra.mxu0 0.0
  %166 = vmatprep.subr.mxu0 0.0
  %167 = vmatpush2.msra.mxu0 0.0
  %168 = vmatprep.subr.mxu0 0.0
  %169 = vmatpush2.msra.mxu0 0.0
  %170 = vmatprep.subr.mxu0 0.0
  %171 = vmatpush2.msra.mxu0 0.0
  %172 = vmatprep.subr.mxu0 0.0
  %173 = vmatpush2.msra.mxu0 0.0
  %174 = vmatprep.subr.mxu0 0.0
  %175 = vmatpush2.msra.mxu0 0.0
  %176 = vmatprep.subr.mxu0 0.0
  %177 = vmatpush2.msra.mxu0 0.0
  %178 = vmatprep.subr.mxu0 0.0
  %179 = vmatpush2.msra.mxu0 0.0
  %180 = vmatprep.subr.mxu0 0.0
  %181 = vmatpush2.msra.mxu0 0.0
  %182 = vmatprep.subr.mxu0 0.0
  %183 = vmatpush2.msra.mxu0 0.0
  %184 = vmatprep.subr.mxu0 0.0
  %185 = vmatpush2.msra.mxu0 0.0
  %186 = vmatprep.subr.mxu0 0.0
  %187 = vmatpush2.msra.mxu0 0.0
  %188 = vmatprep.subr.mxu0 0.0
  %189 = vmatpush2.msra.mxu0 0.0
  %190 = vmatprep.mubr.f32.mxu0 0.0
  %191 = vmatmul.mubr.f32.gmra.mxu0 %v21
  %v192 = vpop.f32.mrf.mxu0
  %v193 = vadd.f32 0.0, %v192
  %v194 = vpop.f32.mrf.mxu0
  %v195 = vadd.f32 0.0, %v194
  %196 = vdwg.mxu0
  %197 = vmatprep.subr.mxu0 0.0
  %198 = vmatpush1.msra.mxu0 0.0
  %199 = vmatprep.subr.mxu0 0.0
  %200 = vmatpush1.msra.mxu0 0.0
  %201 = vmatprep.subr.mxu0 0.0
  %202 = vmatpush1.msra.mxu0 0.0
  %203 = vmatprep.subr.mxu0 0.0
  %204 = vmatpush1.msra.mxu0 0.0
  %205 = vmatprep.subr.mxu0 0.0
  %206 = vmatpush1.msra.mxu0 0.0
  %207 = vmatprep.subr.mxu0 0.0
  %208 = vmatpush1.msra.mxu0 0.0
  %209 = vmatprep.subr.mxu0 0.0
  %210 = vmatpush1.msra.mxu0 0.0
  %211 = vmatprep.subr.mxu0 0.0
  %212 = vmatpush1.msra.mxu0 0.0
  %213 = vmatprep.subr.mxu0 0.0
  %214 = vmatpush1.msra.mxu0 0.0
  %215 = vmatprep.subr.mxu0 0.0
  %216 = vmatpush1.msra.mxu0 0.0
  %217 = vmatprep.subr.mxu0 0.0
  %218 = vmatpush1.msra.mxu0 0.0
  %219 = vmatprep.subr.mxu0 0.0
  %220 = vmatpush1.msra.mxu0 0.0
  %221 = vmatprep.subr.mxu0 %v124
  %222 = vmatpush1.msra.mxu0 %v121
  %223 = vmatprep.subr.mxu0 %v109
  %224 = vmatpush1.msra.mxu0 %v108
  %225 = vmatprep.subr.mxu0 %v105
  %226 = vmatpush1.msra.mxu0 %v104
  %227 = vmatprep.subr.mxu0 %v101
  %228 = vmatpush1.msra.mxu0 %v100
  %229 = vmatprep.subr.mxu0 0.0
  %230 = vmatpush2.msra.mxu0 0.0
  %231 = vmatprep.subr.mxu0 0.0
  %232 = vmatpush2.msra.mxu0 0.0
  %233 = vmatprep.subr.mxu0 0.0
  %234 = vmatpush2.msra.mxu0 0.0
  %235 = vmatprep.subr.mxu0 0.0
  %236 = vmatpush2.msra.mxu0 0.0
  %237 = vmatprep.subr.mxu0 0.0
  %238 = vmatpush2.msra.mxu0 0.0
  %239 = vmatprep.subr.mxu0 0.0
  %240 = vmatpush2.msra.mxu0 0.0
  %241 = vmatprep.subr.mxu0 0.0
  %242 = vmatpush2.msra.mxu0 0.0
  %243 = vmatprep.subr.mxu0 0.0
  %244 = vmatpush2.msra.mxu0 0.0
  %245 = vmatprep.subr.mxu0 0.0
  %246 = vmatpush2.msra.mxu0 0.0
  %247 = vmatprep.subr.mxu0 0.0
  %248 = vmatpush2.msra.mxu0 0.0
  %249 = vmatprep.subr.mxu0 0.0
  %250 = vmatpush2.msra.mxu0 0.0
  %251 = vmatprep.subr.mxu0 0.0
  %252 = vmatpush2.msra.mxu0 0.0
  %253 = vmatprep.subr.mxu0 0.0
  %254 = vmatpush2.msra.mxu0 0.0
  %255 = vmatprep.subr.mxu0 0.0
  %256 = vmatpush2.msra.mxu0 0.0
  %257 = vmatprep.subr.mxu0 0.0
  %258 = vmatpush2.msra.mxu0 0.0
  %259 = vmatprep.subr.mxu0 0.0
  %260 = vmatpush2.msra.mxu0 0.0
  %261 = vmatprep.mubr.f32.mxu0 0.0
  %262 = vmatmul.mubr.f32.gmra.mxu0 %v21
  %v263 = vpop.f32.mrf.mxu0
  %v264 = vadd.f32 0.0, %v263
  %v265 = vpop.f32.mrf.mxu0
  %v266 = vadd.f32 0.0, %v265
  %267 = vdwg.mxu0
  %v268 = vmax.f32 %v193, 0.0
  %v269 = vmax.f32 %v195, 0.0
  %v270 = vmax.f32 %v264, 0.0
  %v271 = vmax.f32 %v266, 0.0
  %273 = vset.pattern.permute.xlu0 0
  %274 = vperm.xlu0 %273, %v97
  %v275 = vpop.permute.xlu0 %274
  %v277 = vmul.f32 %v275, %v268
  %v278 = vmul.f32 %v275, %v269
  %v279 = vadd.f32 %v277, 0.0
  %v280 = vadd.f32 %v278, 0.0
  %281 = vset.pattern.permute.xlu0 1
  %282 = vperm.xlu0 %281, %v97
  %v283 = vpop.permute.xlu0 %282
  %v285 = vmul.f32 %v283, %v268
  %v286 = vmul.f32 %v283, %v269
  %289 = vrot.lane.b32.xlu0 %v285, 127
  %v290 = vpop.permute.xlu0 %289
  %291 = vrot.lane.b32.xlu0 %v286, 127
  %v292 = vpop.permute.xlu0 %291
  %vm293 = vcmask 1039360
  %v294 = vsel %vm293, %v290, %v292
  %v297 = vadd.f32 %v279, %v294
  %v298 = vadd.f32 %v280, %v292
  %299 = vset.pattern.permute.xlu0 2
  %300 = vperm.xlu0 %299, %v97
  %v301 = vpop.permute.xlu0 %300
  %v303 = vmul.f32 %v301, %v268
  %v304 = vmul.f32 %v301, %v269
  %307 = vrot.lane.b32.xlu0 %v303, 126
  %v308 = vpop.permute.xlu0 %307
  %309 = vrot.lane.b32.xlu0 %v304, 126
  %v310 = vpop.permute.xlu0 %309
  %vm311 = vcmask 1031168
  %v312 = vsel %vm311, %v308, %v310
  %v315 = vadd.f32 %v297, %v312
  %v316 = vadd.f32 %v298, %v310
  %317 = vset.pattern.permute.xlu0 3
  %318 = vperm.xlu0 %317, %v97
  %v319 = vpop.permute.xlu0 %318
  %v321 = vmul.f32 %v319, %v268
  %v322 = vmul.f32 %v319, %v269
  %325 = vrot.lane.b32.xlu0 %v321, 125
  %v326 = vpop.permute.xlu0 %325
  %327 = vrot.lane.b32.xlu0 %v322, 125
  %v328 = vpop.permute.xlu0 %327
  %vm329 = vcmask 1022976
  %v330 = vsel %vm329, %v326, %v328
  %v333 = vadd.f32 %v315, %v330
  %v334 = vadd.f32 %v316, %v328
  %335 = vset.pattern.permute.xlu0 4
  %336 = vperm.xlu0 %335, %v97
  %v337 = vpop.permute.xlu0 %336
  %v339 = vmul.f32 %v337, %v268
  %v340 = vmul.f32 %v337, %v269
  %343 = vrot.lane.b32.xlu0 %v339, 124
  %v344 = vpop.permute.xlu0 %343
  %345 = vrot.lane.b32.xlu0 %v340, 124
  %v346 = vpop.permute.xlu0 %345
  %vm347 = vcmask 1014784
  %v348 = vsel %vm347, %v344, %v346
  %v351 = vadd.f32 %v333, %v348
  %v352 = vadd.f32 %v334, %v346
  %353 = vset.pattern.permute.xlu0 5
  %354 = vperm.xlu0 %353, %v97
  %v355 = vpop.permute.xlu0 %354
  %v357 = vmul.f32 %v355, %v268
  %v358 = vmul.f32 %v355, %v269
  %361 = vrot.lane.b32.xlu0 %v357, 123
  %v362 = vpop.permute.xlu0 %361
  %363 = vrot.lane.b32.xlu0 %v358, 123
  %v364 = vpop.permute.xlu0 %363
  %vm365 = vcmask 1006592
  %v366 = vsel %vm365, %v362, %v364
  %v369 = vadd.f32 %v351, %v366
  %v370 = vadd.f32 %v352, %v364
  %371 = vset.pattern.permute.xlu0 6
  %372 = vperm.xlu0 %371, %v97
  %v373 = vpop.permute.xlu0 %372
  %v375 = vmul.f32 %v373, %v268
  %v376 = vmul.f32 %v373, %v269
  %379 = vrot.lane.b32.xlu0 %v375, 122
  %v380 = vpop.permute.xlu0 %379
  %381 = vrot.lane.b32.xlu0 %v376, 122
  %v382 = vpop.permute.xlu0 %381
  %vm383 = vcmask 998400
  %v384 = vsel %vm383, %v380, %v382
  %v387 = vadd.f32 %v369, %v384
  %v388 = vadd.f32 %v370, %v382
  %389 = vset.pattern.permute.xlu0 7
  %390 = vperm.xlu0 %389, %v97
  %v391 = vpop.permute.xlu0 %390
  %v393 = vmul.f32 %v391, %v268
  %v394 = vmul.f32 %v391, %v269
  %397 = vrot.lane.b32.xlu0 %v393, 113
  %v398 = vpop.permute.xlu0 %397
  %399 = vrot.lane.b32.xlu0 %v394, 113
  %v400 = vpop.permute.xlu0 %399
  %vm401 = vcmask 924672
  %v402 = vsel %vm401, %v398, %v400
  %v405 = vadd.f32 %v387, %v402
  %v406 = vadd.f32 %v388, %v400
  %407 = vset.pattern.permute.xlu0 8
  %408 = vperm.xlu0 %407, %v97
  %v409 = vpop.permute.xlu0 %408
  %v411 = vmul.f32 %v409, %v268
  %v412 = vmul.f32 %v409, %v269
  %415 = vrot.lane.b32.xlu0 %v411, 112
  %v416 = vpop.permute.xlu0 %415
  %417 = vrot.lane.b32.xlu0 %v412, 112
  %v418 = vpop.permute.xlu0 %417
  %vm419 = vcmask 916480
  %v420 = vsel %vm419, %v416, %v418
  %v423 = vadd.f32 %v405, %v420
  %v424 = vadd.f32 %v406, %v418
  %425 = vset.pattern.permute.xlu0 9
  %426 = vperm.xlu0 %425, %v97
  %v427 = vpop.permute.xlu0 %426
  %v429 = vmul.f32 %v427, %v268
  %v430 = vmul.f32 %v427, %v269
  %433 = vrot.lane.b32.xlu0 %v429, 111
  %v434 = vpop.permute.xlu0 %433
  %435 = vrot.lane.b32.xlu0 %v430, 111
  %v436 = vpop.permute.xlu0 %435
  %vm437 = vcmask 908288
  %v438 = vsel %vm437, %v434, %v436
  %v441 = vadd.f32 %v423, %v438
  %v442 = vadd.f32 %v424, %v436
  %443 = vset.pattern.permute.xlu0 10
  %444 = vperm.xlu0 %443, %v97
  %v445 = vpop.permute.xlu0 %444
  %v447 = vmul.f32 %v445, %v268
  %v448 = vmul.f32 %v445, %v269
  %451 = vrot.lane.b32.xlu0 %v447, 110
  %v452 = vpop.permute.xlu0 %451
  %453 = vrot.lane.b32.xlu0 %v448, 110
  %v454 = vpop.permute.xlu0 %453
  %vm455 = vcmask 900096
  %v456 = vsel %vm455, %v452, %v454
  %v459 = vadd.f32 %v441, %v456
  %v460 = vadd.f32 %v442, %v454
  %461 = vset.pattern.permute.xlu0 11
  %462 = vperm.xlu0 %461, %v97
  %v463 = vpop.permute.xlu0 %462
  %v465 = vmul.f32 %v463, %v268
  %v466 = vmul.f32 %v463, %v269
  %469 = vrot.lane.b32.xlu0 %v465, 109
  %v470 = vpop.permute.xlu0 %469
  %471 = vrot.lane.b32.xlu0 %v466, 109
  %v472 = vpop.permute.xlu0 %471
  %vm473 = vcmask 891904
  %v474 = vsel %vm473, %v470, %v472
  %v477 = vadd.f32 %v459, %v474
  %v478 = vadd.f32 %v460, %v472
  %479 = vset.pattern.permute.xlu0 12
  %480 = vperm.xlu0 %479, %v97
  %v481 = vpop.permute.xlu0 %480
  %v483 = vmul.f32 %v481, %v268
  %v484 = vmul.f32 %v481, %v269
  %487 = vrot.lane.b32.xlu0 %v483, 108
  %v488 = vpop.permute.xlu0 %487
  %489 = vrot.lane.b32.xlu0 %v484, 108
  %v490 = vpop.permute.xlu0 %489
  %vm491 = vcmask 883712
  %v492 = vsel %vm491, %v488, %v490
  %v495 = vadd.f32 %v477, %v492
  %v496 = vadd.f32 %v478, %v490
  %497 = vset.pattern.permute.xlu0 13
  %498 = vperm.xlu0 %497, %v97
  %v499 = vpop.permute.xlu0 %498
  %v501 = vmul.f32 %v499, %v268
  %v502 = vmul.f32 %v499, %v269
  %505 = vrot.lane.b32.xlu0 %v501, 107
  %v506 = vpop.permute.xlu0 %505
  %507 = vrot.lane.b32.xlu0 %v502, 107
  %v508 = vpop.permute.xlu0 %507
  %vm509 = vcmask 875520
  %v510 = vsel %vm509, %v506, %v508
  %v513 = vadd.f32 %v495, %v510
  %v514 = vadd.f32 %v496, %v508
  %515 = vset.pattern.permute.xlu0 14
  %516 = vperm.xlu0 %515, %v97
  %v517 = vpop.permute.xlu0 %516
  %v519 = vmul.f32 %v517, %v268
  %v520 = vmul.f32 %v517, %v269
  %523 = vrot.lane.b32.xlu0 %v519, 98
  %v524 = vpop.permute.xlu0 %523
  %525 = vrot.lane.b32.xlu0 %v520, 98
  %v526 = vpop.permute.xlu0 %525
  %vm527 = vcmask 801792
  %v528 = vsel %vm527, %v524, %v526
  %v531 = vadd.f32 %v513, %v528
  %v532 = vadd.f32 %v514, %v526
  %533 = vset.pattern.permute.xlu0 15
  %534 = vperm.xlu0 %533, %v97
  %v535 = vpop.permute.xlu0 %534
  %v537 = vmul.f32 %v535, %v268
  %v538 = vmul.f32 %v535, %v269
  %541 = vrot.lane.b32.xlu0 %v537, 97
  %v542 = vpop.permute.xlu0 %541
  %543 = vrot.lane.b32.xlu0 %v538, 97
  %v544 = vpop.permute.xlu0 %543
  %vm545 = vcmask 793600
  %v546 = vsel %vm545, %v542, %v544
  %v549 = vadd.f32 %v531, %v546
  %v550 = vadd.f32 %v532, %v544
  %551 = vset.pattern.permute.xlu0 16
  %552 = vperm.xlu0 %551, %v97
  %v553 = vpop.permute.xlu0 %552
  %v555 = vmul.f32 %v553, %v268
  %v556 = vmul.f32 %v553, %v269
  %559 = vrot.lane.b32.xlu0 %v555, 96
  %v560 = vpop.permute.xlu0 %559
  %561 = vrot.lane.b32.xlu0 %v556, 96
  %v562 = vpop.permute.xlu0 %561
  %vm563 = vcmask 785408
  %v564 = vsel %vm563, %v560, %v562
  %v567 = vadd.f32 %v549, %v564
  %v568 = vadd.f32 %v550, %v562
  %569 = vset.pattern.permute.xlu0 17
  %570 = vperm.xlu0 %569, %v97
  %v571 = vpop.permute.xlu0 %570
  %v573 = vmul.f32 %v571, %v268
  %v574 = vmul.f32 %v571, %v269
  %577 = vrot.lane.b32.xlu0 %v573, 95
  %v578 = vpop.permute.xlu0 %577
  %579 = vrot.lane.b32.xlu0 %v574, 95
  %v580 = vpop.permute.xlu0 %579
  %vm581 = vcmask 777216
  %v582 = vsel %vm581, %v578, %v580
  %v585 = vadd.f32 %v567, %v582
  %v586 = vadd.f32 %v568, %v580
  %587 = vset.pattern.permute.xlu0 18
  %588 = vperm.xlu0 %587, %v97
  %v589 = vpop.permute.xlu0 %588
  %v591 = vmul.f32 %v589, %v268
  %v592 = vmul.f32 %v589, %v269
  %595 = vrot.lane.b32.xlu0 %v591, 94
  %v596 = vpop.permute.xlu0 %595
  %597 = vrot.lane.b32.xlu0 %v592, 94
  %v598 = vpop.permute.xlu0 %597
  %vm599 = vcmask 769024
  %v600 = vsel %vm599, %v596, %v598
  %v603 = vadd.f32 %v585, %v600
  %v604 = vadd.f32 %v586, %v598
  %605 = vset.pattern.permute.xlu0 19
  %606 = vperm.xlu0 %605, %v97
  %v607 = vpop.permute.xlu0 %606
  %v609 = vmul.f32 %v607, %v268
  %v610 = vmul.f32 %v607, %v269
  %613 = vrot.lane.b32.xlu0 %v609, 93
  %v614 = vpop.permute.xlu0 %613
  %615 = vrot.lane.b32.xlu0 %v610, 93
  %v616 = vpop.permute.xlu0 %615
  %vm617 = vcmask 760832
  %v618 = vsel %vm617, %v614, %v616
  %v621 = vadd.f32 %v603, %v618
  %v622 = vadd.f32 %v604, %v616
  %623 = vset.pattern.permute.xlu0 20
  %624 = vperm.xlu0 %623, %v97
  %v625 = vpop.permute.xlu0 %624
  %v627 = vmul.f32 %v625, %v268
  %v628 = vmul.f32 %v625, %v269
  %631 = vrot.lane.b32.xlu0 %v627, 92
  %v632 = vpop.permute.xlu0 %631
  %633 = vrot.lane.b32.xlu0 %v628, 92
  %v634 = vpop.permute.xlu0 %633
  %vm635 = vcmask 752640
  %v636 = vsel %vm635, %v632, %v634
  %v639 = vadd.f32 %v621, %v636
  %v640 = vadd.f32 %v622, %v634
  %641 = vset.pattern.permute.xlu0 21
  %642 = vperm.xlu0 %641, %v97
  %v643 = vpop.permute.xlu0 %642
  %v645 = vmul.f32 %v643, %v268
  %v646 = vmul.f32 %v643, %v269
  %649 = vrot.lane.b32.xlu0 %v645, 83
  %v650 = vpop.permute.xlu0 %649
  %651 = vrot.lane.b32.xlu0 %v646, 83
  %v652 = vpop.permute.xlu0 %651
  %vm653 = vcmask 678912
  %v654 = vsel %vm653, %v650, %v652
  %v657 = vadd.f32 %v639, %v654
  %v658 = vadd.f32 %v640, %v652
  %659 = vset.pattern.permute.xlu0 22
  %660 = vperm.xlu0 %659, %v97
  %v661 = vpop.permute.xlu0 %660
  %v663 = vmul.f32 %v661, %v268
  %v664 = vmul.f32 %v661, %v269
  %667 = vrot.lane.b32.xlu0 %v663, 82
  %v668 = vpop.permute.xlu0 %667
  %669 = vrot.lane.b32.xlu0 %v664, 82
  %v670 = vpop.permute.xlu0 %669
  %vm671 = vcmask 670720
  %v672 = vsel %vm671, %v668, %v670
  %v675 = vadd.f32 %v657, %v672
  %v676 = vadd.f32 %v658, %v670
  %677 = vset.pattern.permute.xlu0 23
  %678 = vperm.xlu0 %677, %v97
  %v679 = vpop.permute.xlu0 %678
  %v681 = vmul.f32 %v679, %v268
  %v682 = vmul.f32 %v679, %v269
  %685 = vrot.lane.b32.xlu0 %v681, 81
  %v686 = vpop.permute.xlu0 %685
  %687 = vrot.lane.b32.xlu0 %v682, 81
  %v688 = vpop.permute.xlu0 %687
  %vm689 = vcmask 662528
  %v690 = vsel %vm689, %v686, %v688
  %v693 = vadd.f32 %v675, %v690
  %v694 = vadd.f32 %v676, %v688
  %695 = vset.pattern.permute.xlu0 24
  %696 = vperm.xlu0 %695, %v97
  %v697 = vpop.permute.xlu0 %696
  %v699 = vmul.f32 %v697, %v268
  %v700 = vmul.f32 %v697, %v269
  %703 = vrot.lane.b32.xlu0 %v699, 80
  %v704 = vpop.permute.xlu0 %703
  %705 = vrot.lane.b32.xlu0 %v700, 80
  %v706 = vpop.permute.xlu0 %705
  %vm707 = vcmask 654336
  %v708 = vsel %vm707, %v704, %v706
  %v711 = vadd.f32 %v693, %v708
  %v712 = vadd.f32 %v694, %v706
  %713 = vset.pattern.permute.xlu0 25
  %714 = vperm.xlu0 %713, %v97
  %v715 = vpop.permute.xlu0 %714
  %v717 = vmul.f32 %v715, %v268
  %v718 = vmul.f32 %v715, %v269
  %721 = vrot.lane.b32.xlu0 %v717, 79
  %v722 = vpop.permute.xlu0 %721
  %723 = vrot.lane.b32.xlu0 %v718, 79
  %v724 = vpop.permute.xlu0 %723
  %vm725 = vcmask 646144
  %v726 = vsel %vm725, %v722, %v724
  %v729 = vadd.f32 %v711, %v726
  %v730 = vadd.f32 %v712, %v724
  %731 = vset.pattern.permute.xlu0 26
  %732 = vperm.xlu0 %731, %v97
  %v733 = vpop.permute.xlu0 %732
  %v735 = vmul.f32 %v733, %v268
  %v736 = vmul.f32 %v733, %v269
  %739 = vrot.lane.b32.xlu0 %v735, 78
  %v740 = vpop.permute.xlu0 %739
  %741 = vrot.lane.b32.xlu0 %v736, 78
  %v742 = vpop.permute.xlu0 %741
  %vm743 = vcmask 637952
  %v744 = vsel %vm743, %v740, %v742
  %v747 = vadd.f32 %v729, %v744
  %v748 = vadd.f32 %v730, %v742
  %749 = vset.pattern.permute.xlu0 27
  %750 = vperm.xlu0 %749, %v97
  %v751 = vpop.permute.xlu0 %750
  %v753 = vmul.f32 %v751, %v268
  %v754 = vmul.f32 %v751, %v269
  %757 = vrot.lane.b32.xlu0 %v753, 77
  %v758 = vpop.permute.xlu0 %757
  %759 = vrot.lane.b32.xlu0 %v754, 77
  %v760 = vpop.permute.xlu0 %759
  %vm761 = vcmask 629760
  %v762 = vsel %vm761, %v758, %v760
  %v765 = vadd.f32 %v747, %v762
  %v766 = vadd.f32 %v748, %v760
  %767 = vset.pattern.permute.xlu0 28
  %768 = vperm.xlu0 %767, %v97
  %v769 = vpop.permute.xlu0 %768
  %v771 = vmul.f32 %v769, %v268
  %v772 = vmul.f32 %v769, %v269
  %775 = vrot.lane.b32.xlu0 %v771, 68
  %v776 = vpop.permute.xlu0 %775
  %777 = vrot.lane.b32.xlu0 %v772, 68
  %v778 = vpop.permute.xlu0 %777
  %vm779 = vcmask 556032
  %v780 = vsel %vm779, %v776, %v778
  %v783 = vadd.f32 %v765, %v780
  %v784 = vadd.f32 %v766, %v778
  %785 = vset.pattern.permute.xlu0 29
  %786 = vperm.xlu0 %785, %v97
  %v787 = vpop.permute.xlu0 %786
  %v789 = vmul.f32 %v787, %v268
  %v790 = vmul.f32 %v787, %v269
  %793 = vrot.lane.b32.xlu0 %v789, 67
  %v794 = vpop.permute.xlu0 %793
  %795 = vrot.lane.b32.xlu0 %v790, 67
  %v796 = vpop.permute.xlu0 %795
  %vm797 = vcmask 547840
  %v798 = vsel %vm797, %v794, %v796
  %v801 = vadd.f32 %v783, %v798
  %v802 = vadd.f32 %v784, %v796
  %803 = vset.pattern.permute.xlu0 30
  %804 = vperm.xlu0 %803, %v97
  %v805 = vpop.permute.xlu0 %804
  %v807 = vmul.f32 %v805, %v268
  %v808 = vmul.f32 %v805, %v269
  %811 = vrot.lane.b32.xlu0 %v807, 66
  %v812 = vpop.permute.xlu0 %811
  %813 = vrot.lane.b32.xlu0 %v808, 66
  %v814 = vpop.permute.xlu0 %813
  %vm815 = vcmask 539648
  %v816 = vsel %vm815, %v812, %v814
  %v819 = vadd.f32 %v801, %v816
  %v820 = vadd.f32 %v802, %v814
  %821 = vset.pattern.permute.xlu0 31
  %822 = vperm.xlu0 %821, %v97
  %v823 = vpop.permute.xlu0 %822
  %v825 = vmul.f32 %v823, %v268
  %v826 = vmul.f32 %v823, %v269
  %829 = vrot.lane.b32.xlu0 %v825, 65
  %v830 = vpop.permute.xlu0 %829
  %831 = vrot.lane.b32.xlu0 %v826, 65
  %v832 = vpop.permute.xlu0 %831
  %vm833 = vcmask 531456
  %v834 = vsel %vm833, %v830, %v832
  %v837 = vadd.f32 %v819, %v834
  %v838 = vadd.f32 %v820, %v832
  %839 = vset.pattern.permute.xlu0 32
  %840 = vperm.xlu0 %839, %v97
  %v841 = vpop.permute.xlu0 %840
  %v843 = vmul.f32 %v841, %v268
  %v844 = vmul.f32 %v841, %v269
  %847 = vrot.lane.b32.xlu0 %v843, 64
  %v848 = vpop.permute.xlu0 %847
  %849 = vrot.lane.b32.xlu0 %v844, 64
  %v850 = vpop.permute.xlu0 %849
  %vm851 = vcmask 523264
  %v852 = vsel %vm851, %v848, %v850
  %v855 = vadd.f32 %v837, %v852
  %v856 = vadd.f32 %v838, %v850
  %857 = vset.pattern.permute.xlu0 33
  %858 = vperm.xlu0 %857, %v97
  %v859 = vpop.permute.xlu0 %858
  %v861 = vmul.f32 %v859, %v268
  %v862 = vmul.f32 %v859, %v269
  %865 = vrot.lane.b32.xlu0 %v861, 63
  %v866 = vpop.permute.xlu0 %865
  %867 = vrot.lane.b32.xlu0 %v862, 63
  %v868 = vpop.permute.xlu0 %867
  %vm869 = vcmask 515072
  %v870 = vsel %vm869, %v866, %v868
  %v873 = vadd.f32 %v855, %v870
  %v874 = vadd.f32 %v856, %v868
  %875 = vset.pattern.permute.xlu0 34
  %876 = vperm.xlu0 %875, %v97
  %v877 = vpop.permute.xlu0 %876
  %v879 = vmul.f32 %v877, %v268
  %v880 = vmul.f32 %v877, %v269
  %883 = vrot.lane.b32.xlu0 %v879, 62
  %v884 = vpop.permute.xlu0 %883
  %885 = vrot.lane.b32.xlu0 %v880, 62
  %v886 = vpop.permute.xlu0 %885
  %vm887 = vcmask 506880
  %v888 = vsel %vm887, %v884, %v886
  %v891 = vadd.f32 %v873, %v888
  %v892 = vadd.f32 %v874, %v886
  %893 = vset.pattern.permute.xlu0 35
  %894 = vperm.xlu0 %893, %v97
  %v895 = vpop.permute.xlu0 %894
  %v897 = vmul.f32 %v895, %v268
  %v898 = vmul.f32 %v895, %v269
  %901 = vrot.lane.b32.xlu0 %v897, 53
  %v902 = vpop.permute.xlu0 %901
  %903 = vrot.lane.b32.xlu0 %v898, 53
  %v904 = vpop.permute.xlu0 %903
  %vm905 = vcmask 433152
  %v906 = vsel %vm905, %v902, %v904
  %v909 = vadd.f32 %v891, %v906
  %v910 = vadd.f32 %v892, %v904
  %911 = vset.pattern.permute.xlu0 36
  %912 = vperm.xlu0 %911, %v97
  %v913 = vpop.permute.xlu0 %912
  %v915 = vmul.f32 %v913, %v268
  %v916 = vmul.f32 %v913, %v269
  %919 = vrot.lane.b32.xlu0 %v915, 52
  %v920 = vpop.permute.xlu0 %919
  %921 = vrot.lane.b32.xlu0 %v916, 52
  %v922 = vpop.permute.xlu0 %921
  %vm923 = vcmask 424960
  %v924 = vsel %vm923, %v920, %v922
  %v927 = vadd.f32 %v909, %v924
  %v928 = vadd.f32 %v910, %v922
  %929 = vset.pattern.permute.xlu0 37
  %930 = vperm.xlu0 %929, %v97
  %v931 = vpop.permute.xlu0 %930
  %v933 = vmul.f32 %v931, %v268
  %v934 = vmul.f32 %v931, %v269
  %937 = vrot.lane.b32.xlu0 %v933, 51
  %v938 = vpop.permute.xlu0 %937
  %939 = vrot.lane.b32.xlu0 %v934, 51
  %v940 = vpop.permute.xlu0 %939
  %vm941 = vcmask 416768
  %v942 = vsel %vm941, %v938, %v940
  %v945 = vadd.f32 %v927, %v942
  %v946 = vadd.f32 %v928, %v940
  %947 = vset.pattern.permute.xlu0 38
  %948 = vperm.xlu0 %947, %v97
  %v949 = vpop.permute.xlu0 %948
  %v951 = vmul.f32 %v949, %v268
  %v952 = vmul.f32 %v949, %v269
  %955 = vrot.lane.b32.xlu0 %v951, 50
  %v956 = vpop.permute.xlu0 %955
  %957 = vrot.lane.b32.xlu0 %v952, 50
  %v958 = vpop.permute.xlu0 %957
  %vm959 = vcmask 408576
  %v960 = vsel %vm959, %v956, %v958
  %v963 = vadd.f32 %v945, %v960
  %v964 = vadd.f32 %v946, %v958
  %965 = vset.pattern.permute.xlu0 39
  %966 = vperm.xlu0 %965, %v97
  %v967 = vpop.permute.xlu0 %966
  %v969 = vmul.f32 %v967, %v268
  %v970 = vmul.f32 %v967, %v269
  %973 = vrot.lane.b32.xlu0 %v969, 49
  %v974 = vpop.permute.xlu0 %973
  %975 = vrot.lane.b32.xlu0 %v970, 49
  %v976 = vpop.permute.xlu0 %975
  %vm977 = vcmask 400384
  %v978 = vsel %vm977, %v974, %v976
  %v981 = vadd.f32 %v963, %v978
  %v982 = vadd.f32 %v964, %v976
  %983 = vset.pattern.permute.xlu0 40
  %984 = vperm.xlu0 %983, %v97
  %v985 = vpop.permute.xlu0 %984
  %v987 = vmul.f32 %v985, %v268
  %v988 = vmul.f32 %v985, %v269
  %991 = vrot.lane.b32.xlu0 %v987, 48
  %v992 = vpop.permute.xlu0 %991
  %993 = vrot.lane.b32.xlu0 %v988, 48
  %v994 = vpop.permute.xlu0 %993
  %vm995 = vcmask 392192
  %v996 = vsel %vm995, %v992, %v994
  %v999 = vadd.f32 %v981, %v996
  %v1000 = vadd.f32 %v982, %v994
  %1001 = vset.pattern.permute.xlu0 41
  %1002 = vperm.xlu0 %1001, %v97
  %v1003 = vpop.permute.xlu0 %1002
  %v1005 = vmul.f32 %v1003, %v268
  %v1006 = vmul.f32 %v1003, %v269
  %1009 = vrot.lane.b32.xlu0 %v1005, 47
  %v1010 = vpop.permute.xlu0 %1009
  %1011 = vrot.lane.b32.xlu0 %v1006, 47
  %v1012 = vpop.permute.xlu0 %1011
  %vm1013 = vcmask 384000
  %v1014 = vsel %vm1013, %v1010, %v1012
  %v1017 = vadd.f32 %v999, %v1014
  %v1018 = vadd.f32 %v1000, %v1012
  %1019 = vset.pattern.permute.xlu0 42
  %1020 = vperm.xlu0 %1019, %v97
  %v1021 = vpop.permute.xlu0 %1020
  %v1023 = vmul.f32 %v1021, %v268
  %v1024 = vmul.f32 %v1021, %v269
  %1027 = vrot.lane.b32.xlu0 %v1023, 38
  %v1028 = vpop.permute.xlu0 %1027
  %1029 = vrot.lane.b32.xlu0 %v1024, 38
  %v1030 = vpop.permute.xlu0 %1029
  %vm1031 = vcmask 310272
  %v1032 = vsel %vm1031, %v1028, %v1030
  %v1035 = vadd.f32 %v1017, %v1032
  %v1036 = vadd.f32 %v1018, %v1030
  %1037 = vset.pattern.permute.xlu0 43
  %1038 = vperm.xlu0 %1037, %v97
  %v1039 = vpop.permute.xlu0 %1038
  %v1041 = vmul.f32 %v1039, %v268
  %v1042 = vmul.f32 %v1039, %v269
  %1045 = vrot.lane.b32.xlu0 %v1041, 37
  %v1046 = vpop.permute.xlu0 %1045
  %1047 = vrot.lane.b32.xlu0 %v1042, 37
  %v1048 = vpop.permute.xlu0 %1047
  %vm1049 = vcmask 302080
  %v1050 = vsel %vm1049, %v1046, %v1048
  %v1053 = vadd.f32 %v1035, %v1050
  %v1054 = vadd.f32 %v1036, %v1048
  %1055 = vset.pattern.permute.xlu0 44
  %1056 = vperm.xlu0 %1055, %v97
  %v1057 = vpop.permute.xlu0 %1056
  %v1059 = vmul.f32 %v1057, %v268
  %v1060 = vmul.f32 %v1057, %v269
  %1063 = vrot.lane.b32.xlu0 %v1059, 36
  %v1064 = vpop.permute.xlu0 %1063
  %1065 = vrot.lane.b32.xlu0 %v1060, 36
  %v1066 = vpop.permute.xlu0 %1065
  %vm1067 = vcmask 293888
  %v1068 = vsel %vm1067, %v1064, %v1066
  %v1071 = vadd.f32 %v1053, %v1068
  %v1072 = vadd.f32 %v1054, %v1066
  %1073 = vset.pattern.permute.xlu0 45
  %1074 = vperm.xlu0 %1073, %v97
  %v1075 = vpop.permute.xlu0 %1074
  %v1077 = vmul.f32 %v1075, %v268
  %v1078 = vmul.f32 %v1075, %v269
  %1081 = vrot.lane.b32.xlu0 %v1077, 35
  %v1082 = vpop.permute.xlu0 %1081
  %1083 = vrot.lane.b32.xlu0 %v1078, 35
  %v1084 = vpop.permute.xlu0 %1083
  %vm1085 = vcmask 285696
  %v1086 = vsel %vm1085, %v1082, %v1084
  %v1089 = vadd.f32 %v1071, %v1086
  %v1090 = vadd.f32 %v1072, %v1084
  %1091 = vset.pattern.permute.xlu0 46
  %1092 = vperm.xlu0 %1091, %v97
  %v1093 = vpop.permute.xlu0 %1092
  %v1095 = vmul.f32 %v1093, %v268
  %v1096 = vmul.f32 %v1093, %v269
  %1099 = vrot.lane.b32.xlu0 %v1095, 34
  %v1100 = vpop.permute.xlu0 %1099
  %1101 = vrot.lane.b32.xlu0 %v1096, 34
  %v1102 = vpop.permute.xlu0 %1101
  %vm1103 = vcmask 277504
  %v1104 = vsel %vm1103, %v1100, %v1102
  %v1107 = vadd.f32 %v1089, %v1104
  %v1108 = vadd.f32 %v1090, %v1102
  %1109 = vset.pattern.permute.xlu0 47
  %1110 = vperm.xlu0 %1109, %v97
  %v1111 = vpop.permute.xlu0 %1110
  %v1113 = vmul.f32 %v1111, %v268
  %v1114 = vmul.f32 %v1111, %v269
  %1117 = vrot.lane.b32.xlu0 %v1113, 33
  %v1118 = vpop.permute.xlu0 %1117
  %1119 = vrot.lane.b32.xlu0 %v1114, 33
  %v1120 = vpop.permute.xlu0 %1119
  %vm1121 = vcmask 269312
  %v1122 = vsel %vm1121, %v1118, %v1120
  %v1125 = vadd.f32 %v1107, %v1122
  %v1126 = vadd.f32 %v1108, %v1120
  %1127 = vset.pattern.permute.xlu0 48
  %1128 = vperm.xlu0 %1127, %v97
  %v1129 = vpop.permute.xlu0 %1128
  %v1131 = vmul.f32 %v1129, %v268
  %v1132 = vmul.f32 %v1129, %v269
  %1135 = vrot.lane.b32.xlu0 %v1131, 32
  %v1136 = vpop.permute.xlu0 %1135
  %1137 = vrot.lane.b32.xlu0 %v1132, 32
  %v1138 = vpop.permute.xlu0 %1137
  %vm1139 = vcmask 261120
  %v1140 = vsel %vm1139, %v1136, %v1138
  %v1143 = vadd.f32 %v1125, %v1140
  %v1144 = vadd.f32 %v1126, %v1138
  %v1147 = vrot.slane %v1143, 1
  %v1148 = vrot.slane %v1144, 1
  %v1151 = vadd.f32 %v1143, %v1147
  %v1152 = vadd.f32 %v1144, %v1148
  %v1155 = vcombine.low %v1151, %v1152
  %v1157 = vunpack.c.l.s4 1966171168
  %v1158 = vunpack.c.0.s8 %v1157
  %v1159 = vlaneseq
  %v1160 = vshrl.u32 %v1159, 7
  %v1161 = vsub.s32 %v1158, %v1160
  %v1162 = vrot.slane %v1155, %v1161
  %v1164 = vunpack.c.l.s4 1966171168
  %v1165 = vunpack.c.0.s8 %v1164
  %v1166 = vlaneseq
  %v1167 = vshrl.u32 %v1166, 7
  %v1168 = vsub.s32 %v1165, %v1167
  %v1169 = vrot.slane %v1162, %v1168
  %v1171 = vlaneseq
  %vm1172 = vcmp.ge.s32.totalorder %v1171, 0
  %vm1173 = vcmp.lt.s32.totalorder %v1171, 135
  %vm1174 = vmand %vm1172, %vm1173
  %1175 = vst.msk [vmem:[%s3] ss:$8 sm:$0x3] %vm1174, %v1169
  %1176 = vst.msk [vmem:[%s3] ss:$8 sm:$0x0] %vm1174, %v1169
  %v1177 = vcombine.high %v1169, %v1169
  %s1179 = scalar_lea.vmem %s3, 1
  %1180 = vst.msk [vmem:[%s1179] ss:$8 sm:$0x3] %vm1174, %v1177
  %1181 = vst.msk [vmem:[%s1179] ss:$8 sm:$0x0] %vm1174, %v1177
  %v1182 = vcombine.high %v1151, %v1152
  %v1184 = vunpack.c.l.s4 1966171168
  %v1185 = vunpack.c.0.s8 %v1184
  %v1186 = vlaneseq
  %v1187 = vshrl.u32 %v1186, 7
  %v1188 = vsub.s32 %v1185, %v1187
  %v1189 = vrot.slane %v1182, %v1188
  %v1191 = vunpack.c.l.s4 1966171168
  %v1192 = vunpack.c.0.s8 %v1191
  %v1193 = vlaneseq
  %v1194 = vshrl.u32 %v1193, 7
  %v1195 = vsub.s32 %v1192, %v1194
  %v1196 = vrot.slane %v1189, %v1195
  %s1198 = scalar_lea.vmem %s3, 2
  %1199 = vst.msk [vmem:[%s1198] ss:$8 sm:$0x3] %vm1174, %v1196
  %1200 = vst.msk [vmem:[%s1198] ss:$8 sm:$0x0] %vm1174, %v1196
  %1201 = vset.pattern.permute.xlu0 49
  %1202 = vperm.xlu0 %1201, %v97
  %v1203 = vpop.permute.xlu0 %1202
  %v1205 = vmul.f32 %v1203, %v269
  %v1206 = vmul.f32 %v1203, %v270
  %v1207 = vadd.f32 %v1205, 0.0
  %v1208 = vadd.f32 %v1206, 0.0
  %1209 = vset.pattern.permute.xlu0 50
  %1210 = vperm.xlu0 %1209, %v97
  %v1211 = vpop.permute.xlu0 %1210
  %v1213 = vmul.f32 %v1211, %v269
  %v1214 = vmul.f32 %v1211, %v270
  %1217 = vrot.lane.b32.xlu0 %v1213, 127
  %v1218 = vpop.permute.xlu0 %1217
  %1219 = vrot.lane.b32.xlu0 %v1214, 127
  %v1220 = vpop.permute.xlu0 %1219
  %v1221 = vsel %vm293, %v1218, %v1220
  %v1224 = vadd.f32 %v1207, %v1221
  %v1225 = vadd.f32 %v1208, %v1220
  %1226 = vset.pattern.permute.xlu0 51
  %1227 = vperm.xlu0 %1226, %v97
  %v1228 = vpop.permute.xlu0 %1227
  %v1230 = vmul.f32 %v1228, %v269
  %v1231 = vmul.f32 %v1228, %v270
  %1234 = vrot.lane.b32.xlu0 %v1230, 126
  %v1235 = vpop.permute.xlu0 %1234
  %1236 = vrot.lane.b32.xlu0 %v1231, 126
  %v1237 = vpop.permute.xlu0 %1236
  %v1238 = vsel %vm311, %v1235, %v1237
  %v1241 = vadd.f32 %v1224, %v1238
  %v1242 = vadd.f32 %v1225, %v1237
  %1243 = vset.pattern.permute.xlu0 52
  %1244 = vperm.xlu0 %1243, %v97
  %v1245 = vpop.permute.xlu0 %1244
  %v1247 = vmul.f32 %v1245, %v269
  %v1248 = vmul.f32 %v1245, %v270
  %1251 = vrot.lane.b32.xlu0 %v1247, 125
  %v1252 = vpop.permute.xlu0 %1251
  %1253 = vrot.lane.b32.xlu0 %v1248, 125
  %v1254 = vpop.permute.xlu0 %1253
  %v1255 = vsel %vm329, %v1252, %v1254
  %v1258 = vadd.f32 %v1241, %v1255
  %v1259 = vadd.f32 %v1242, %v1254
  %1260 = vset.pattern.permute.xlu0 53
  %1261 = vperm.xlu0 %1260, %v97
  %v1262 = vpop.permute.xlu0 %1261
  %v1264 = vmul.f32 %v1262, %v269
  %v1265 = vmul.f32 %v1262, %v270
  %1268 = vrot.lane.b32.xlu0 %v1264, 124
  %v1269 = vpop.permute.xlu0 %1268
  %1270 = vrot.lane.b32.xlu0 %v1265, 124
  %v1271 = vpop.permute.xlu0 %1270
  %v1272 = vsel %vm347, %v1269, %v1271
  %v1275 = vadd.f32 %v1258, %v1272
  %v1276 = vadd.f32 %v1259, %v1271
  %1277 = vset.pattern.permute.xlu0 54
  %1278 = vperm.xlu0 %1277, %v97
  %v1279 = vpop.permute.xlu0 %1278
  %v1281 = vmul.f32 %v1279, %v269
  %v1282 = vmul.f32 %v1279, %v270
  %1285 = vrot.lane.b32.xlu0 %v1281, 123
  %v1286 = vpop.permute.xlu0 %1285
  %1287 = vrot.lane.b32.xlu0 %v1282, 123
  %v1288 = vpop.permute.xlu0 %1287
  %v1289 = vsel %vm365, %v1286, %v1288
  %v1292 = vadd.f32 %v1275, %v1289
  %v1293 = vadd.f32 %v1276, %v1288
  %1294 = vset.pattern.permute.xlu0 55
  %1295 = vperm.xlu0 %1294, %v97
  %v1296 = vpop.permute.xlu0 %1295
  %v1298 = vmul.f32 %v1296, %v269
  %v1299 = vmul.f32 %v1296, %v270
  %1302 = vrot.lane.b32.xlu0 %v1298, 122
  %v1303 = vpop.permute.xlu0 %1302
  %1304 = vrot.lane.b32.xlu0 %v1299, 122
  %v1305 = vpop.permute.xlu0 %1304
  %v1306 = vsel %vm383, %v1303, %v1305
  %v1309 = vadd.f32 %v1292, %v1306
  %v1310 = vadd.f32 %v1293, %v1305
  %1311 = vset.pattern.permute.xlu0 56
  %1312 = vperm.xlu0 %1311, %v97
  %v1313 = vpop.permute.xlu0 %1312
  %v1315 = vmul.f32 %v1313, %v269
  %v1316 = vmul.f32 %v1313, %v270
  %1319 = vrot.lane.b32.xlu0 %v1315, 113
  %v1320 = vpop.permute.xlu0 %1319
  %1321 = vrot.lane.b32.xlu0 %v1316, 113
  %v1322 = vpop.permute.xlu0 %1321
  %v1323 = vsel %vm401, %v1320, %v1322
  %v1326 = vadd.f32 %v1309, %v1323
  %v1327 = vadd.f32 %v1310, %v1322
  %1328 = vset.pattern.permute.xlu0 57
  %1329 = vperm.xlu0 %1328, %v97
  %v1330 = vpop.permute.xlu0 %1329
  %v1332 = vmul.f32 %v1330, %v269
  %v1333 = vmul.f32 %v1330, %v270
  %1336 = vrot.lane.b32.xlu0 %v1332, 112
  %v1337 = vpop.permute.xlu0 %1336
  %1338 = vrot.lane.b32.xlu0 %v1333, 112
  %v1339 = vpop.permute.xlu0 %1338
  %v1340 = vsel %vm419, %v1337, %v1339
  %v1343 = vadd.f32 %v1326, %v1340
  %v1344 = vadd.f32 %v1327, %v1339
  %1345 = vset.pattern.permute.xlu0 58
  %1346 = vperm.xlu0 %1345, %v97
  %v1347 = vpop.permute.xlu0 %1346
  %v1349 = vmul.f32 %v1347, %v269
  %v1350 = vmul.f32 %v1347, %v270
  %1353 = vrot.lane.b32.xlu0 %v1349, 111
  %v1354 = vpop.permute.xlu0 %1353
  %1355 = vrot.lane.b32.xlu0 %v1350, 111
  %v1356 = vpop.permute.xlu0 %1355
  %v1357 = vsel %vm437, %v1354, %v1356
  %v1360 = vadd.f32 %v1343, %v1357
  %v1361 = vadd.f32 %v1344, %v1356
  %1362 = vset.pattern.permute.xlu0 59
  %1363 = vperm.xlu0 %1362, %v97
  %v1364 = vpop.permute.xlu0 %1363
  %v1366 = vmul.f32 %v1364, %v269
  %v1367 = vmul.f32 %v1364, %v270
  %1370 = vrot.lane.b32.xlu0 %v1366, 110
  %v1371 = vpop.permute.xlu0 %1370
  %1372 = vrot.lane.b32.xlu0 %v1367, 110
  %v1373 = vpop.permute.xlu0 %1372
  %v1374 = vsel %vm455, %v1371, %v1373
  %v1377 = vadd.f32 %v1360, %v1374
  %v1378 = vadd.f32 %v1361, %v1373
  %1379 = vset.pattern.permute.xlu0 60
  %1380 = vperm.xlu0 %1379, %v97
  %v1381 = vpop.permute.xlu0 %1380
  %v1383 = vmul.f32 %v1381, %v269
  %v1384 = vmul.f32 %v1381, %v270
  %v1385 = vmul.f32 %v1381, %v271
  %1389 = vrot.lane.b32.xlu0 %v1383, 109
  %v1390 = vpop.permute.xlu0 %1389
  %1391 = vrot.lane.b32.xlu0 %v1384, 109
  %v1392 = vpop.permute.xlu0 %1391
  %1393 = vrot.lane.b32.xlu0 %v1385, 109
  %v1394 = vpop.permute.xlu0 %1393
  %v1395 = vsel %vm473, %v1390, %v1392
  %v1396 = vsel %vm473, %v1392, %v1394
  %v1399 = vadd.f32 %v1377, %v1395
  %v1400 = vadd.f32 %v1378, %v1396
  %1401 = vset.pattern.permute.xlu0 61
  %1402 = vperm.xlu0 %1401, %v97
  %v1403 = vpop.permute.xlu0 %1402
  %v1405 = vmul.f32 %v1403, %v269
  %v1406 = vmul.f32 %v1403, %v270
  %v1407 = vmul.f32 %v1403, %v271
  %1411 = vrot.lane.b32.xlu0 %v1405, 108
  %v1412 = vpop.permute.xlu0 %1411
  %1413 = vrot.lane.b32.xlu0 %v1406, 108
  %v1414 = vpop.permute.xlu0 %1413
  %1415 = vrot.lane.b32.xlu0 %v1407, 108
  %v1416 = vpop.permute.xlu0 %1415
  %v1417 = vsel %vm491, %v1412, %v1414
  %v1418 = vsel %vm491, %v1414, %v1416
  %v1421 = vadd.f32 %v1399, %v1417
  %v1422 = vadd.f32 %v1400, %v1418
  %1423 = vset.pattern.permute.xlu0 62
  %1424 = vperm.xlu0 %1423, %v97
  %v1425 = vpop.permute.xlu0 %1424
  %v1427 = vmul.f32 %v1425, %v269
  %v1428 = vmul.f32 %v1425, %v270
  %v1429 = vmul.f32 %v1425, %v271
  %1433 = vrot.lane.b32.xlu0 %v1427, 107
  %v1434 = vpop.permute.xlu0 %1433
  %1435 = vrot.lane.b32.xlu0 %v1428, 107
  %v1436 = vpop.permute.xlu0 %1435
  %1437 = vrot.lane.b32.xlu0 %v1429, 107
  %v1438 = vpop.permute.xlu0 %1437
  %v1439 = vsel %vm509, %v1434, %v1436
  %v1440 = vsel %vm509, %v1436, %v1438
  %v1443 = vadd.f32 %v1421, %v1439
  %v1444 = vadd.f32 %v1422, %v1440
  %1445 = vset.pattern.permute.xlu0 63
  %1446 = vperm.xlu0 %1445, %v97
  %v1447 = vpop.permute.xlu0 %1446
  %v1449 = vmul.f32 %v1447, %v270
  %v1450 = vmul.f32 %v1447, %v271
  %1453 = vrot.lane.b32.xlu0 %v1449, 98
  %v1454 = vpop.permute.xlu0 %1453
  %1455 = vrot.lane.b32.xlu0 %v1450, 98
  %v1456 = vpop.permute.xlu0 %1455
  %v1457 = vsel %vm527, %v1454, %v1456
  %v1460 = vadd.f32 %v1443, %v1454
  %v1461 = vadd.f32 %v1444, %v1457
  %1462 = vset.pattern.permute.xlu0 64
  %1463 = vperm.xlu0 %1462, %v97
  %v1464 = vpop.permute.xlu0 %1463
  %v1466 = vmul.f32 %v1464, %v270
  %v1467 = vmul.f32 %v1464, %v271
  %1470 = vrot.lane.b32.xlu0 %v1466, 97
  %v1471 = vpop.permute.xlu0 %1470
  %1472 = vrot.lane.b32.xlu0 %v1467, 97
  %v1473 = vpop.permute.xlu0 %1472
  %v1474 = vsel %vm545, %v1471, %v1473
  %v1477 = vadd.f32 %v1460, %v1471
  %v1478 = vadd.f32 %v1461, %v1474
  %1479 = vset.pattern.permute.xlu0 65
  %1480 = vperm.xlu0 %1479, %v97
  %v1481 = vpop.permute.xlu0 %1480
  %v1483 = vmul.f32 %v1481, %v270
  %v1484 = vmul.f32 %v1481, %v271
  %1487 = vrot.lane.b32.xlu0 %v1483, 96
  %v1488 = vpop.permute.xlu0 %1487
  %1489 = vrot.lane.b32.xlu0 %v1484, 96
  %v1490 = vpop.permute.xlu0 %1489
  %v1491 = vsel %vm563, %v1488, %v1490
  %v1494 = vadd.f32 %v1477, %v1488
  %v1495 = vadd.f32 %v1478, %v1491
  %1496 = vset.pattern.permute.xlu0 66
  %1497 = vperm.xlu0 %1496, %v97
  %v1498 = vpop.permute.xlu0 %1497
  %v1500 = vmul.f32 %v1498, %v270
  %v1501 = vmul.f32 %v1498, %v271
  %1504 = vrot.lane.b32.xlu0 %v1500, 95
  %v1505 = vpop.permute.xlu0 %1504
  %1506 = vrot.lane.b32.xlu0 %v1501, 95
  %v1507 = vpop.permute.xlu0 %1506
  %v1508 = vsel %vm581, %v1505, %v1507
  %v1511 = vadd.f32 %v1494, %v1505
  %v1512 = vadd.f32 %v1495, %v1508
  %1513 = vset.pattern.permute.xlu0 67
  %1514 = vperm.xlu0 %1513, %v97
  %v1515 = vpop.permute.xlu0 %1514
  %v1517 = vmul.f32 %v1515, %v270
  %v1518 = vmul.f32 %v1515, %v271
  %1521 = vrot.lane.b32.xlu0 %v1517, 94
  %v1522 = vpop.permute.xlu0 %1521
  %1523 = vrot.lane.b32.xlu0 %v1518, 94
  %v1524 = vpop.permute.xlu0 %1523
  %v1525 = vsel %vm599, %v1522, %v1524
  %v1528 = vadd.f32 %v1511, %v1522
  %v1529 = vadd.f32 %v1512, %v1525
  %1530 = vset.pattern.permute.xlu0 68
  %1531 = vperm.xlu0 %1530, %v97
  %v1532 = vpop.permute.xlu0 %1531
  %v1534 = vmul.f32 %v1532, %v270
  %v1535 = vmul.f32 %v1532, %v271
  %1538 = vrot.lane.b32.xlu0 %v1534, 93
  %v1539 = vpop.permute.xlu0 %1538
  %1540 = vrot.lane.b32.xlu0 %v1535, 93
  %v1541 = vpop.permute.xlu0 %1540
  %v1542 = vsel %vm617, %v1539, %v1541
  %v1545 = vadd.f32 %v1528, %v1539
  %v1546 = vadd.f32 %v1529, %v1542
  %1547 = vset.pattern.permute.xlu0 69
  %1548 = vperm.xlu0 %1547, %v97
  %v1549 = vpop.permute.xlu0 %1548
  %v1551 = vmul.f32 %v1549, %v270
  %v1552 = vmul.f32 %v1549, %v271
  %1555 = vrot.lane.b32.xlu0 %v1551, 92
  %v1556 = vpop.permute.xlu0 %1555
  %1557 = vrot.lane.b32.xlu0 %v1552, 92
  %v1558 = vpop.permute.xlu0 %1557
  %v1559 = vsel %vm635, %v1556, %v1558
  %v1562 = vadd.f32 %v1545, %v1556
  %v1563 = vadd.f32 %v1546, %v1559
  %1564 = vset.pattern.permute.xlu0 70
  %1565 = vperm.xlu0 %1564, %v97
  %v1566 = vpop.permute.xlu0 %1565
  %v1568 = vmul.f32 %v1566, %v270
  %v1569 = vmul.f32 %v1566, %v271
  %1572 = vrot.lane.b32.xlu0 %v1568, 83
  %v1573 = vpop.permute.xlu0 %1572
  %1574 = vrot.lane.b32.xlu0 %v1569, 83
  %v1575 = vpop.permute.xlu0 %1574
  %v1576 = vsel %vm653, %v1573, %v1575
  %v1579 = vadd.f32 %v1562, %v1573
  %v1580 = vadd.f32 %v1563, %v1576
  %1581 = vset.pattern.permute.xlu0 71
  %1582 = vperm.xlu0 %1581, %v97
  %v1583 = vpop.permute.xlu0 %1582
  %v1585 = vmul.f32 %v1583, %v270
  %v1586 = vmul.f32 %v1583, %v271
  %1589 = vrot.lane.b32.xlu0 %v1585, 82
  %v1590 = vpop.permute.xlu0 %1589
  %1591 = vrot.lane.b32.xlu0 %v1586, 82
  %v1592 = vpop.permute.xlu0 %1591
  %v1593 = vsel %vm671, %v1590, %v1592
  %v1596 = vadd.f32 %v1579, %v1590
  %v1597 = vadd.f32 %v1580, %v1593
  %1598 = vset.pattern.permute.xlu0 72
  %1599 = vperm.xlu0 %1598, %v97
  %v1600 = vpop.permute.xlu0 %1599
  %v1602 = vmul.f32 %v1600, %v270
  %v1603 = vmul.f32 %v1600, %v271
  %1606 = vrot.lane.b32.xlu0 %v1602, 81
  %v1607 = vpop.permute.xlu0 %1606
  %1608 = vrot.lane.b32.xlu0 %v1603, 81
  %v1609 = vpop.permute.xlu0 %1608
  %v1610 = vsel %vm689, %v1607, %v1609
  %v1613 = vadd.f32 %v1596, %v1607
  %v1614 = vadd.f32 %v1597, %v1610
  %1615 = vset.pattern.permute.xlu0 73
  %1616 = vperm.xlu0 %1615, %v97
  %v1617 = vpop.permute.xlu0 %1616
  %v1619 = vmul.f32 %v1617, %v270
  %v1620 = vmul.f32 %v1617, %v271
  %1623 = vrot.lane.b32.xlu0 %v1619, 80
  %v1624 = vpop.permute.xlu0 %1623
  %1625 = vrot.lane.b32.xlu0 %v1620, 80
  %v1626 = vpop.permute.xlu0 %1625
  %v1627 = vsel %vm707, %v1624, %v1626
  %v1630 = vadd.f32 %v1613, %v1624
  %v1631 = vadd.f32 %v1614, %v1627
  %1632 = vset.pattern.permute.xlu0 74
  %1633 = vperm.xlu0 %1632, %v97
  %v1634 = vpop.permute.xlu0 %1633
  %v1636 = vmul.f32 %v1634, %v270
  %v1637 = vmul.f32 %v1634, %v271
  %1640 = vrot.lane.b32.xlu0 %v1636, 79
  %v1641 = vpop.permute.xlu0 %1640
  %1642 = vrot.lane.b32.xlu0 %v1637, 79
  %v1643 = vpop.permute.xlu0 %1642
  %v1644 = vsel %vm725, %v1641, %v1643
  %v1647 = vadd.f32 %v1630, %v1641
  %v1648 = vadd.f32 %v1631, %v1644
  %1649 = vset.pattern.permute.xlu0 75
  %1650 = vperm.xlu0 %1649, %v97
  %v1651 = vpop.permute.xlu0 %1650
  %v1653 = vmul.f32 %v1651, %v270
  %v1654 = vmul.f32 %v1651, %v271
  %1657 = vrot.lane.b32.xlu0 %v1653, 78
  %v1658 = vpop.permute.xlu0 %1657
  %1659 = vrot.lane.b32.xlu0 %v1654, 78
  %v1660 = vpop.permute.xlu0 %1659
  %v1661 = vsel %vm743, %v1658, %v1660
  %v1664 = vadd.f32 %v1647, %v1658
  %v1665 = vadd.f32 %v1648, %v1661
  %1666 = vset.pattern.permute.xlu0 76
  %1667 = vperm.xlu0 %1666, %v97
  %v1668 = vpop.permute.xlu0 %1667
  %v1670 = vmul.f32 %v1668, %v270
  %v1671 = vmul.f32 %v1668, %v271
  %1674 = vrot.lane.b32.xlu0 %v1670, 77
  %v1675 = vpop.permute.xlu0 %1674
  %1676 = vrot.lane.b32.xlu0 %v1671, 77
  %v1677 = vpop.permute.xlu0 %1676
  %v1678 = vsel %vm761, %v1675, %v1677
  %v1681 = vadd.f32 %v1664, %v1675
  %v1682 = vadd.f32 %v1665, %v1678
  %1683 = vset.pattern.permute.xlu0 77
  %1684 = vperm.xlu0 %1683, %v97
  %v1685 = vpop.permute.xlu0 %1684
  %v1687 = vmul.f32 %v1685, %v270
  %v1688 = vmul.f32 %v1685, %v271
  %1691 = vrot.lane.b32.xlu0 %v1687, 68
  %v1692 = vpop.permute.xlu0 %1691
  %1693 = vrot.lane.b32.xlu0 %v1688, 68
  %v1694 = vpop.permute.xlu0 %1693
  %v1695 = vsel %vm779, %v1692, %v1694
  %v1698 = vadd.f32 %v1681, %v1692
  %v1699 = vadd.f32 %v1682, %v1695
  %1700 = vset.pattern.permute.xlu0 78
  %1701 = vperm.xlu0 %1700, %v97
  %v1702 = vpop.permute.xlu0 %1701
  %v1704 = vmul.f32 %v1702, %v270
  %v1705 = vmul.f32 %v1702, %v271
  %1708 = vrot.lane.b32.xlu0 %v1704, 67
  %v1709 = vpop.permute.xlu0 %1708
  %1710 = vrot.lane.b32.xlu0 %v1705, 67
  %v1711 = vpop.permute.xlu0 %1710
  %v1712 = vsel %vm797, %v1709, %v1711
  %v1715 = vadd.f32 %v1698, %v1709
  %v1716 = vadd.f32 %v1699, %v1712
  %1717 = vset.pattern.permute.xlu0 79
  %1718 = vperm.xlu0 %1717, %v97
  %v1719 = vpop.permute.xlu0 %1718
  %v1721 = vmul.f32 %v1719, %v270
  %v1722 = vmul.f32 %v1719, %v271
  %1725 = vrot.lane.b32.xlu0 %v1721, 66
  %v1726 = vpop.permute.xlu0 %1725
  %1727 = vrot.lane.b32.xlu0 %v1722, 66
  %v1728 = vpop.permute.xlu0 %1727
  %v1729 = vsel %vm815, %v1726, %v1728
  %v1732 = vadd.f32 %v1715, %v1726
  %v1733 = vadd.f32 %v1716, %v1729
  %1734 = vset.pattern.permute.xlu0 80
  %1735 = vperm.xlu0 %1734, %v97
  %v1736 = vpop.permute.xlu0 %1735
  %v1738 = vmul.f32 %v1736, %v270
  %v1739 = vmul.f32 %v1736, %v271
  %1742 = vrot.lane.b32.xlu0 %v1738, 65
  %v1743 = vpop.permute.xlu0 %1742
  %1744 = vrot.lane.b32.xlu0 %v1739, 65
  %v1745 = vpop.permute.xlu0 %1744
  %v1746 = vsel %vm833, %v1743, %v1745
  %v1749 = vadd.f32 %v1732, %v1743
  %v1750 = vadd.f32 %v1733, %v1746
  %1751 = vset.pattern.permute.xlu0 81
  %1752 = vperm.xlu0 %1751, %v97
  %v1753 = vpop.permute.xlu0 %1752
  %v1755 = vmul.f32 %v1753, %v270
  %v1756 = vmul.f32 %v1753, %v271
  %1759 = vrot.lane.b32.xlu0 %v1755, 64
  %v1760 = vpop.permute.xlu0 %1759
  %1761 = vrot.lane.b32.xlu0 %v1756, 64
  %v1762 = vpop.permute.xlu0 %1761
  %v1763 = vsel %vm851, %v1760, %v1762
  %v1766 = vadd.f32 %v1749, %v1760
  %v1767 = vadd.f32 %v1750, %v1763
  %1768 = vset.pattern.permute.xlu0 82
  %1769 = vperm.xlu0 %1768, %v97
  %v1770 = vpop.permute.xlu0 %1769
  %v1772 = vmul.f32 %v1770, %v270
  %v1773 = vmul.f32 %v1770, %v271
  %1776 = vrot.lane.b32.xlu0 %v1772, 63
  %v1777 = vpop.permute.xlu0 %1776
  %1778 = vrot.lane.b32.xlu0 %v1773, 63
  %v1779 = vpop.permute.xlu0 %1778
  %v1780 = vsel %vm869, %v1777, %v1779
  %v1783 = vadd.f32 %v1766, %v1777
  %v1784 = vadd.f32 %v1767, %v1780
  %1785 = vset.pattern.permute.xlu0 83
  %1786 = vperm.xlu0 %1785, %v97
  %v1787 = vpop.permute.xlu0 %1786
  %v1789 = vmul.f32 %v1787, %v270
  %v1790 = vmul.f32 %v1787, %v271
  %1793 = vrot.lane.b32.xlu0 %v1789, 62
  %v1794 = vpop.permute.xlu0 %1793
  %1795 = vrot.lane.b32.xlu0 %v1790, 62
  %v1796 = vpop.permute.xlu0 %1795
  %v1797 = vsel %vm887, %v1794, %v1796
  %v1800 = vadd.f32 %v1783, %v1794
  %v1801 = vadd.f32 %v1784, %v1797
  %1802 = vset.pattern.permute.xlu0 84
  %1803 = vperm.xlu0 %1802, %v97
  %v1804 = vpop.permute.xlu0 %1803
  %v1806 = vmul.f32 %v1804, %v270
  %v1807 = vmul.f32 %v1804, %v271
  %1810 = vrot.lane.b32.xlu0 %v1806, 53
  %v1811 = vpop.permute.xlu0 %1810
  %1812 = vrot.lane.b32.xlu0 %v1807, 53
  %v1813 = vpop.permute.xlu0 %1812
  %v1814 = vsel %vm905, %v1811, %v1813
  %v1817 = vadd.f32 %v1800, %v1811
  %v1818 = vadd.f32 %v1801, %v1814
  %1819 = vset.pattern.permute.xlu0 85
  %1820 = vperm.xlu0 %1819, %v97
  %v1821 = vpop.permute.xlu0 %1820
  %v1823 = vmul.f32 %v1821, %v270
  %v1824 = vmul.f32 %v1821, %v271
  %1827 = vrot.lane.b32.xlu0 %v1823, 52
  %v1828 = vpop.permute.xlu0 %1827
  %1829 = vrot.lane.b32.xlu0 %v1824, 52
  %v1830 = vpop.permute.xlu0 %1829
  %v1831 = vsel %vm923, %v1828, %v1830
  %v1834 = vadd.f32 %v1817, %v1828
  %v1835 = vadd.f32 %v1818, %v1831
  %1836 = vset.pattern.permute.xlu0 86
  %1837 = vperm.xlu0 %1836, %v97
  %v1838 = vpop.permute.xlu0 %1837
  %v1840 = vmul.f32 %v1838, %v270
  %v1841 = vmul.f32 %v1838, %v271
  %1844 = vrot.lane.b32.xlu0 %v1840, 51
  %v1845 = vpop.permute.xlu0 %1844
  %1846 = vrot.lane.b32.xlu0 %v1841, 51
  %v1847 = vpop.permute.xlu0 %1846
  %v1848 = vsel %vm941, %v1845, %v1847
  %v1851 = vadd.f32 %v1834, %v1845
  %v1852 = vadd.f32 %v1835, %v1848
  %1853 = vset.pattern.permute.xlu0 87
  %1854 = vperm.xlu0 %1853, %v97
  %v1855 = vpop.permute.xlu0 %1854
  %v1857 = vmul.f32 %v1855, %v270
  %v1858 = vmul.f32 %v1855, %v271
  %1861 = vrot.lane.b32.xlu0 %v1857, 50
  %v1862 = vpop.permute.xlu0 %1861
  %1863 = vrot.lane.b32.xlu0 %v1858, 50
  %v1864 = vpop.permute.xlu0 %1863
  %v1865 = vsel %vm959, %v1862, %v1864
  %v1868 = vadd.f32 %v1851, %v1862
  %v1869 = vadd.f32 %v1852, %v1865
  %1870 = vset.pattern.permute.xlu0 88
  %1871 = vperm.xlu0 %1870, %v97
  %v1872 = vpop.permute.xlu0 %1871
  %v1874 = vmul.f32 %v1872, %v270
  %v1875 = vmul.f32 %v1872, %v271
  %1878 = vrot.lane.b32.xlu0 %v1874, 49
  %v1879 = vpop.permute.xlu0 %1878
  %1880 = vrot.lane.b32.xlu0 %v1875, 49
  %v1881 = vpop.permute.xlu0 %1880
  %v1882 = vsel %vm977, %v1879, %v1881
  %v1885 = vadd.f32 %v1868, %v1879
  %v1886 = vadd.f32 %v1869, %v1882
  %1887 = vset.pattern.permute.xlu0 89
  %1888 = vperm.xlu0 %1887, %v97
  %v1889 = vpop.permute.xlu0 %1888
  %v1891 = vmul.f32 %v1889, %v270
  %v1892 = vmul.f32 %v1889, %v271
  %1895 = vrot.lane.b32.xlu0 %v1891, 48
  %v1896 = vpop.permute.xlu0 %1895
  %1897 = vrot.lane.b32.xlu0 %v1892, 48
  %v1898 = vpop.permute.xlu0 %1897
  %v1899 = vsel %vm995, %v1896, %v1898
  %v1902 = vadd.f32 %v1885, %v1896
  %v1903 = vadd.f32 %v1886, %v1899
  %1904 = vset.pattern.permute.xlu0 90
  %1905 = vperm.xlu0 %1904, %v97
  %v1906 = vpop.permute.xlu0 %1905
  %v1908 = vmul.f32 %v1906, %v270
  %v1909 = vmul.f32 %v1906, %v271
  %1912 = vrot.lane.b32.xlu0 %v1908, 47
  %v1913 = vpop.permute.xlu0 %1912
  %1914 = vrot.lane.b32.xlu0 %v1909, 47
  %v1915 = vpop.permute.xlu0 %1914
  %v1916 = vsel %vm1013, %v1913, %v1915
  %v1919 = vadd.f32 %v1902, %v1913
  %v1920 = vadd.f32 %v1903, %v1916
  %1921 = vset.pattern.permute.xlu0 91
  %1922 = vperm.xlu0 %1921, %v97
  %v1923 = vpop.permute.xlu0 %1922
  %v1925 = vmul.f32 %v1923, %v270
  %v1926 = vmul.f32 %v1923, %v271
  %1929 = vrot.lane.b32.xlu0 %v1925, 38
  %v1930 = vpop.permute.xlu0 %1929
  %1931 = vrot.lane.b32.xlu0 %v1926, 38
  %v1932 = vpop.permute.xlu0 %1931
  %v1933 = vsel %vm1031, %v1930, %v1932
  %v1936 = vadd.f32 %v1919, %v1930
  %v1937 = vadd.f32 %v1920, %v1933
  %1938 = vset.pattern.permute.xlu0 92
  %1939 = vperm.xlu0 %1938, %v97
  %v1940 = vpop.permute.xlu0 %1939
  %v1942 = vmul.f32 %v1940, %v270
  %v1943 = vmul.f32 %v1940, %v271
  %1946 = vrot.lane.b32.xlu0 %v1942, 37
  %v1947 = vpop.permute.xlu0 %1946
  %1948 = vrot.lane.b32.xlu0 %v1943, 37
  %v1949 = vpop.permute.xlu0 %1948
  %v1950 = vsel %vm1049, %v1947, %v1949
  %v1953 = vadd.f32 %v1936, %v1947
  %v1954 = vadd.f32 %v1937, %v1950
  %1955 = vset.pattern.permute.xlu0 93
  %1956 = vperm.xlu0 %1955, %v97
  %v1957 = vpop.permute.xlu0 %1956
  %v1959 = vmul.f32 %v1957, %v270
  %v1960 = vmul.f32 %v1957, %v271
  %1963 = vrot.lane.b32.xlu0 %v1959, 36
  %v1964 = vpop.permute.xlu0 %1963
  %1965 = vrot.lane.b32.xlu0 %v1960, 36
  %v1966 = vpop.permute.xlu0 %1965
  %v1967 = vsel %vm1067, %v1964, %v1966
  %v1970 = vadd.f32 %v1953, %v1964
  %v1971 = vadd.f32 %v1954, %v1967
  %1972 = vset.pattern.permute.xlu0 94
  %1973 = vperm.xlu0 %1972, %v97
  %v1974 = vpop.permute.xlu0 %1973
  %v1976 = vmul.f32 %v1974, %v270
  %v1977 = vmul.f32 %v1974, %v271
  %1980 = vrot.lane.b32.xlu0 %v1976, 35
  %v1981 = vpop.permute.xlu0 %1980
  %1982 = vrot.lane.b32.xlu0 %v1977, 35
  %v1983 = vpop.permute.xlu0 %1982
  %v1984 = vsel %vm1085, %v1981, %v1983
  %v1987 = vadd.f32 %v1970, %v1981
  %v1988 = vadd.f32 %v1971, %v1984
  %1989 = vset.pattern.permute.xlu0 95
  %1990 = vperm.xlu0 %1989, %v97
  %v1991 = vpop.permute.xlu0 %1990
  %v1993 = vmul.f32 %v1991, %v270
  %v1994 = vmul.f32 %v1991, %v271
  %1997 = vrot.lane.b32.xlu0 %v1993, 34
  %v1998 = vpop.permute.xlu0 %1997
  %1999 = vrot.lane.b32.xlu0 %v1994, 34
  %v2000 = vpop.permute.xlu0 %1999
  %v2001 = vsel %vm1103, %v1998, %v2000
  %v2004 = vadd.f32 %v1987, %v1998
  %v2005 = vadd.f32 %v1988, %v2001
  %2006 = vset.pattern.permute.xlu0 96
  %2007 = vperm.xlu0 %2006, %v97
  %v2008 = vpop.permute.xlu0 %2007
  %v2010 = vmul.f32 %v2008, %v270
  %v2011 = vmul.f32 %v2008, %v271
  %2014 = vrot.lane.b32.xlu0 %v2010, 33
  %v2015 = vpop.permute.xlu0 %2014
  %2016 = vrot.lane.b32.xlu0 %v2011, 33
  %v2017 = vpop.permute.xlu0 %2016
  %v2018 = vsel %vm1121, %v2015, %v2017
  %v2021 = vadd.f32 %v2004, %v2015
  %v2022 = vadd.f32 %v2005, %v2018
  %2023 = vset.pattern.permute.xlu0 97
  %2024 = vperm.xlu0 %2023, %v97
  %v2025 = vpop.permute.xlu0 %2024
  %v2027 = vmul.f32 %v2025, %v270
  %v2028 = vmul.f32 %v2025, %v271
  %2031 = vrot.lane.b32.xlu0 %v2027, 32
  %v2032 = vpop.permute.xlu0 %2031
  %2033 = vrot.lane.b32.xlu0 %v2028, 32
  %v2034 = vpop.permute.xlu0 %2033
  %v2035 = vsel %vm1139, %v2032, %v2034
  %v2038 = vadd.f32 %v2021, %v2032
  %v2039 = vadd.f32 %v2022, %v2035
  %v2042 = vrot.slane %v2038, 1
  %v2043 = vrot.slane %v2039, 1
  %v2046 = vadd.f32 %v2038, %v2042
  %v2047 = vadd.f32 %v2039, %v2043
  %v2050 = vcombine.low %v2046, %v2047
  %v2052 = vunpack.c.l.s4 1966171168
  %v2053 = vunpack.c.0.s8 %v2052
  %v2054 = vlaneseq
  %v2055 = vshrl.u32 %v2054, 7
  %v2056 = vsub.s32 %v2053, %v2055
  %v2057 = vrot.slane %v2050, %v2056
  %v2059 = vunpack.c.l.s4 1966171168
  %v2060 = vunpack.c.0.s8 %v2059
  %v2061 = vlaneseq
  %v2062 = vshrl.u32 %v2061, 7
  %v2063 = vsub.s32 %v2060, %v2062
  %v2064 = vrot.slane %v2057, %v2063
  %2065 = vrot.lane.b32.xlu0 %v2064, 25
  %v2066 = vpop.permute.xlu0 %2065
  %v2067 = vrot.slane %v2066, 1
  %vm2068 = vcmask 203776
  %v2069 = vsel %vm2068, %v2066, %v2067
  %s2071 = scalar_lea.vmem %s3, 3
  %2072 = vst.msk [vmem:[%s2071] ss:$8 sm:$0x3] %vm1174, %v2069
  %2073 = vst.msk [vmem:[%s2071] ss:$8 sm:$0x0] %vm1174, %v2069
  %v2074 = vcombine.high %v2064, %v2064
  %2075 = vrot.lane.b32.xlu0 %v2074, 25
  %v2076 = vpop.permute.xlu0 %2075
  %v2077 = vrot.slane %v2076, 1
  %v2078 = vsel %vm2068, %v2076, %v2077
  %s2080 = scalar_lea.vmem %s3, 4
  %2081 = vst.msk [vmem:[%s2080] ss:$8 sm:$0x3] %vm1174, %v2078
  %2082 = vst.msk [vmem:[%s2080] ss:$8 sm:$0x0] %vm1174, %v2078
  %v2083 = vcombine.high %v2046, %v2047
  %v2085 = vunpack.c.l.s4 1966171168
  %v2086 = vunpack.c.0.s8 %v2085
  %v2087 = vlaneseq
  %v2088 = vshrl.u32 %v2087, 7
  %v2089 = vsub.s32 %v2086, %v2088
  %v2090 = vrot.slane %v2083, %v2089
  %v2092 = vunpack.c.l.s4 1966171168
  %v2093 = vunpack.c.0.s8 %v2092
  %v2094 = vlaneseq
  %v2095 = vshrl.u32 %v2094, 7
  %v2096 = vsub.s32 %v2093, %v2095
  %v2097 = vrot.slane %v2090, %v2096
  %2098 = vrot.lane.b32.xlu0 %v2097, 25
  %v2099 = vpop.permute.xlu0 %2098
  %v2100 = vrot.slane %v2099, 1
  %v2101 = vsel %vm2068, %v2099, %v2100
  %s2103 = scalar_lea.vmem %s3, 5
  %2104 = vst.msk [vmem:[%s2103] ss:$8 sm:$0x3] %vm1174, %v2101
  %2105 = vst.msk [vmem:[%s2103] ss:$8 sm:$0x0] %vm1174, %v2101
  // Predicated region
  $region14: #{siamese_forward.1} parent=0 // pred_check
    _
  $region15: #{siamese_forward.1} parent=0 // pred_check_branch
    %2107 = sbr.rel (0) target = $region17
  $region16: #{siamese_forward.1} parent=0 // pred_region
    _
  $region17: #{siamese_forward.1} parent=0 // pred_fallthru
    _
  // Predicated region
  $region18: #{siamese_forward.1} parent=0 // pred_check
    _
  $region19: #{siamese_forward.1} parent=0 // pred_check_branch
    %2109 = sbr.rel (0) target = $region21
  $region20: #{siamese_forward.1} parent=0 // pred_region
    _
  $region21: #{siamese_forward.1} parent=0 // pred_fallthru
    _

</llo_original>
